<compile_context>
chip_gen: v5e
topology: v5e:2x2
jax: 0.10.0
libtpu: 0.0.40
codegen_flags: <defaults>
</compile_context>

<pallas_src>
import jax
import jax.numpy as jnp
import numpy as np
from jax.experimental import pallas as pl
from jax.experimental.pallas import tpu as pltpu


C8 = 8        # every channel group is padded to one full f32 sublane group
NPAD = 128    # zero margin on each side of the flat-row activation buffers


# ----------------------------------------------------------------------------
# Fused kernel.  Per-batch activations live in flat-row layout
#     buf[c, NPAD + (RS+1) + RS*y + x]      with RS = Wo + 2
# so a 3x3 tap (kh, kw) is a uniform lane shift of RS*(kh-1) + (kw-1), and the
# x2-dilated operand of the transposed conv lives in the same layout with row
# stride RSX = 2*RS.
# ----------------------------------------------------------------------------
def _make_kernel(Cup, RS, RSX, ACC, SCW, BUF):
    f32 = jnp.float32

    # static lane-shift tables (trace-time Python ints)
    up_shifts = []
    for py in range(2):
        for px in range(2):
            up_shifts.append([RSX * (py + a - 1) + 2 * (px + b - 1)
                              - RS * py - px - (RS + 1)
                              for a in range(2) for b in range(2)])
    c_shifts = [RS * (kh - 1) + (kw - 1) for kh in range(3) for kw in range(3)]

    def kernel(xf_ref, br_ref, scat_ref, wup_ref, bup_ref, w1u_ref, w1b_ref,
               b1_ref, w2_ref, b2_ref, mask_ref, o_ref, xd_ref, up_ref, h1_ref):
        mask = mask_ref[...]                           # (1, ACC) valid-cell mask
        zmargin = jnp.zeros((C8, NPAD), f32)

        # -- 0. zero ONLY the margins; interiors are fully rewritten each step --
        xd_ref[:, 0:NPAD] = zmargin
        up_ref[:, 0:NPAD] = zmargin
        up_ref[:, NPAD + ACC:BUF] = zmargin
        h1_ref[:, 0:NPAD] = zmargin
        h1_ref[:, NPAD + ACC:BUF] = zmargin

        # -- 1. x2 zero-inserted x via ONE scatter matmul (lane-dense store) -----
        xd_ref[:, NPAD:NPAD + SCW] = jnp.dot(
            xf_ref[...], scat_ref[...], preferred_element_type=f32)

        def ktaps(ref, shifts):                        # K-stacked shifted operand
            return jnp.concatenate(
                [ref[:, NPAD + s:NPAD + s + ACC] for s in shifts], axis=0)

        # -- 2. ConvTranspose2d(4, s=2, p=1): 4 sub-pixel phase dots, K = 32 -----
        acc = jnp.broadcast_to(bup_ref[...], (C8, ACC))
        for ph in range(4):
            wph = wup_ref[:, ph * 4 * C8:(ph + 1) * 4 * C8]        # (C8, 4*C8)
            acc = acc + jnp.dot(wph, ktaps(xd_ref, up_shifts[ph]),
                                preferred_element_type=f32)
        up_ref[:, NPAD:NPAD + ACC] = acc * mask        # mask implements zero pad

        # -- 3. conv3x3 + ReLU: up half + in-place bridge half (two K=72 dots) ---
        acc1 = jnp.broadcast_to(b1_ref[...], (C8, ACC))
        acc1 = acc1 + jnp.dot(w1u_ref[...], ktaps(up_ref, c_shifts),
                              preferred_element_type=f32)
        acc1 = acc1 + jnp.dot(w1b_ref[...], ktaps(br_ref, c_shifts),
                              preferred_element_type=f32)
        h1_ref[:, NPAD:NPAD + ACC] = jnp.maximum(acc1, 0.0) * mask

        # -- 4. conv3x3 + ReLU -> lane-dense output (wrapper crops border lanes) -
        acc2 = jnp.broadcast_to(b2_ref[...], (Cup, ACC))
        acc2 = acc2 + jnp.dot(w2_ref[...], ktaps(h1_ref, c_shifts),
                              preferred_element_type=f32)
        o_ref[...] = jnp.maximum(acc2, 0.0).astype(o_ref.dtype)

    return kernel


# ----------------------------------------------------------------------------
# UNetUpBlock forward (upconv / padding=True / batch_norm=False)
# ----------------------------------------------------------------------------
def unet_up_block_forward(x, bridge, params):
    """x: (B, in_size, H, W) NCHW; bridge: (B, in_size-out_size, Hb, Wb) NCHW."""
    f32 = jnp.float32
    B, Cin, H, W = x.shape
    Cup = params["up_w"].shape[1]            # out_size
    Cb = Cin - Cup                           # bridge channels
    Ho, Wo = 2 * H, 2 * W                    # spatial size after the up-conv
    assert Cin <= C8 and Cup <= C8 and Cb <= C8, "channel counts must be <= 8"

    RS = Wo + 2                              # flat-row stride (Wo cols + 2 border)
    RSX = 2 * RS                             # row stride of the x2-dilated input
    ACC = pl.cdiv(RS * (Ho + 1), 128) * 128  # lane extent of every accumulator
    SCW = ACC                                # width written by the scatter matmul
    BUF = 2 * NPAD + ACC                     # activation buffer length
    HW = H * W
    assert 3 * RS + 3 <= NPAD                # upconv tap shifts stay in the margin
    assert RS + 1 <= NPAD                    # 3x3 tap shifts stay in the margin
    assert RSX * (H - 1) + 2 * (W - 1) < SCW

    # ---- K-packed weights (channel rows / cols zero-padded to C8) --------------
    def pad_oi(w):                                       # (o, i) -> (C8, C8)
        return jnp.zeros((C8, C8), f32).at[:w.shape[0], :w.shape[1]].set(
            w.astype(f32))

    wt = params["up_w"]                                  # (Cin, Cup, 4, 4)
    blocks = []
    for py in range(2):
        for px in range(2):
            for a in range(2):
                for b in range(2):
                    kh, kw = 3 - py - 2 * a, 3 - px - 2 * b
                    blocks.append(pad_oi(jnp.transpose(wt[:, :, kh, kw])))
    wup = jnp.concatenate(blocks, axis=1)                # (C8, 16*C8) = (8, 128)

    def pack3(w):                                        # (o, i, 3, 3) -> (C8, 9*C8)
        return jnp.concatenate([pad_oi(w[:, :, kh, kw])
                                for kh in range(3) for kw in range(3)], axis=1)

    w1u = pack3(params["c1_w"][:, :Cup])                 # up-channel half  (C8, 72)
    w1b = pack3(params["c1_w"][:, Cup:])                 # bridge half      (C8, 72)
    w2 = pack3(params["c2_w"])[:Cup]                     # (Cup, 72)

    def pad_bias(b, rows):
        return jnp.zeros((rows, 1), f32).at[:b.shape[0], 0].set(b.astype(f32))

    bup = pad_bias(params["up_b"], C8)
    b1 = pad_bias(params["c1_b"], C8)
    b2 = params["c2_b"].reshape(Cup, 1).astype(f32)

    # ---- inputs: flattened x, flat-row bridge (both channel-padded to C8) ------
    xf = jnp.zeros((B, C8, HW), f32).at[:, :Cin, :].set(
        x.reshape(B, Cin, HW).astype(f32))

    Hb, Wb = bridge.shape[2], bridge.shape[3]
    dy, dx = (Hb - Ho) // 2, (Wb - Wo) // 2
    crop = bridge[:, :, dy:dy + Ho, dx:dx + Wo].astype(f32)      # (B, Cb, Ho, Wo)
    brf = jnp.pad(crop, ((0, 0), (0, 0), (0, 0), (0, RS - Wo)))
    brf = brf.reshape(B, Cb, Ho * RS)
    brf = jnp.pad(brf, ((0, 0), (0, 0),
                        (NPAD + RS + 1, BUF - (NPAD + RS + 1) - Ho * RS)))
    br8 = jnp.zeros((B, C8, BUF), f32).at[:, :Cb, :].set(brf)

    # ---- host-precomputed 0/1 scatter matrix for the x2 dilation ----------------
    scat_np = np.zeros((HW, SCW), np.float32)
    for iy in range(H):
        for ix in range(W):
            scat_np[iy * W + ix, RSX * iy + 2 * ix] = 1.0
    scat = jnp.asarray(scat_np)

    # ---- 0/1 mask of the valid interior cells of a flat-row buffer --------------
    mask_np = np.zeros((1, ACC), np.float32)
    for oy in range(Ho):
        st = (RS + 1) + oy * RS
        mask_np[0, st:st + Wo] = 1.0
    mask = jnp.asarray(mask_np)

    kernel = _make_kernel(Cup, RS, RSX, ACC, SCW, BUF)

    out_flat = pl.pallas_call(
        kernel,
        out_shape=jax.ShapeDtypeStruct((B, Cup, ACC), f32),
        grid=(B,),
        in_specs=[
            pl.BlockSpec((None, C8, HW), lambda bb: (bb, 0, 0)),    # x (flat)
            pl.BlockSpec((None, C8, BUF), lambda bb: (bb, 0, 0)),   # bridge (flat)
            pl.BlockSpec((HW, SCW), lambda bb: (0, 0)),             # dilation scatter
            pl.BlockSpec((C8, 16 * C8), lambda bb: (0, 0)),         # upconv weights
            pl.BlockSpec((C8, 1), lambda bb: (0, 0)),               # upconv bias
            pl.BlockSpec((C8, 9 * C8), lambda bb: (0, 0)),          # conv1 w (up)
            pl.BlockSpec((C8, 9 * C8), lambda bb: (0, 0)),          # conv1 w (bridge)
            pl.BlockSpec((C8, 1), lambda bb: (0, 0)),               # conv1 bias
            pl.BlockSpec((Cup, 9 * C8), lambda bb: (0, 0)),         # conv2 w
            pl.BlockSpec((Cup, 1), lambda bb: (0, 0)),              # conv2 bias
            pl.BlockSpec((1, ACC), lambda bb: (0, 0)),              # valid-cell mask
        ],
        out_specs=pl.BlockSpec((None, Cup, ACC), lambda bb: (bb, 0, 0)),
        scratch_shapes=[
            pltpu.VMEM((C8, BUF), f32),       # x2-dilated x
            pltpu.VMEM((C8, BUF), f32),       # upconv output (masked)
            pltpu.VMEM((C8, BUF), f32),       # first conv3x3 output (masked)
        ],
        compiler_params=pltpu.CompilerParams(dimension_semantics=("parallel",)),
    )(xf, br8, scat, wup, bup, w1u, w1b, b1, w2, b2, mask)

    # flat-row layout -> NCHW (pure slice/reshape glue on the final output)
    out = out_flat[:, :, RS + 1:RS + 1 + Ho * RS].reshape(B, Cup, Ho, RS)
    return out[:, :, :, :Wo]


# ----------------------------------------------------------------------------
# Pure-JAX reference (mirrors the PyTorch module) for the correctness check.
# ----------------------------------------------------------------------------
def reference_forward(x, bridge, params):
    wt = params["up_w"]
    w_rot = jnp.transpose(wt, (1, 0, 2, 3))[:, :, ::-1, ::-1]   # (Cout, Cin, 4, 4)
    up = jax.lax.conv_general_dilated(
        x, w_rot, (1, 1), ((2, 2), (2, 2)), lhs_dilation=(2, 2),
        dimension_numbers=("NCHW", "OIHW", "NCHW"))
    up = up + params["up_b"][None, :, None, None]
    Hup, Wup = up.shape[2], up.shape[3]
    Hb, Wb = bridge.shape[2], bridge.shape[3]
    dy, dx = (Hb - Hup) // 2, (Wb - Wup) // 2
    crop = bridge[:, :, dy:dy + Hup, dx:dx + Wup]
    out = jnp.concatenate([up, crop], axis=1)

    def conv3(h, Wc, b):
        y = jax.lax.conv_general_dilated(
            h, Wc, (1, 1), ((1, 1), (1, 1)),
            dimension_numbers=("NCHW", "OIHW", "NCHW"))
        return jnp.maximum(y + b[None, :, None, None], 0.0)

    out = conv3(out, params["c1_w"], params["c1_b"])
    out = conv3(out, params["c2_w"], params["c2_b"])
    return out


if __name__ == "__main__":
    # Config: UNetUpBlock(in_size=8, out_size=4, up_mode='upconv',
    #                     padding=True, batch_norm=False)
    in_size, out_size = 8, 4
    B, H, W = 2, 8, 8

    key = jax.random.PRNGKey(0)
    ks = jax.random.split(key, 8)
    params = {
        "up_w": jax.random.normal(ks[0], (in_size, out_size, 4, 4), jnp.float32) * 0.1,
        "up_b": jax.random.normal(ks[1], (out_size,), jnp.float32) * 0.1,
        "c1_w": jax.random.normal(ks[2], (out_size, in_size, 3, 3), jnp.float32) * 0.1,
        "c1_b": jax.random.normal(ks[3], (out_size,), jnp.float32) * 0.1,
        "c2_w": jax.random.normal(ks[4], (out_size, out_size, 3, 3), jnp.float32) * 0.1,
        "c2_b": jax.random.normal(ks[5], (out_size,), jnp.float32) * 0.1,
    }
    x = jax.random.normal(ks[6], (B, in_size, H, W), jnp.float32)              # NCHW
    bridge = jax.random.normal(ks[7], (B, in_size - out_size, 20, 20), jnp.float32)

    out = jax.block_until_ready(unet_up_block_forward(x, bridge, params))
    ref = jax.block_until_ready(reference_forward(x, bridge, params))

    assert out.shape == (B, out_size, 2 * H, 2 * W), out.shape
    np.testing.assert_allclose(np.asarray(out), np.asarray(ref), rtol=1e-4, atol=1e-4)
    print("KERNEL_OK")
</pallas_src>

<mosaic_0001>
module attributes {stable_mosaic.version = 11 : i64} {
  func.func @kernel(%arg0: i32, %arg1: memref<1x8x64xf32, #tpu.memory_space<vmem>>, %arg2: memref<1x8x640xf32, #tpu.memory_space<vmem>>, %arg3: memref<64x384xf32, #tpu.memory_space<vmem>>, %arg4: memref<8x128xf32, #tpu.memory_space<vmem>>, %arg5: memref<8x1xf32, #tpu.memory_space<vmem>>, %arg6: memref<8x72xf32, #tpu.memory_space<vmem>>, %arg7: memref<8x72xf32, #tpu.memory_space<vmem>>, %arg8: memref<8x1xf32, #tpu.memory_space<vmem>>, %arg9: memref<4x72xf32, #tpu.memory_space<vmem>>, %arg10: memref<4x1xf32, #tpu.memory_space<vmem>>, %arg11: memref<1x384xf32, #tpu.memory_space<vmem>>, %arg12: memref<1x4x384xf32, #tpu.memory_space<vmem>>, %arg13: memref<8x640xf32, #tpu.memory_space<vmem>>, %arg14: memref<8x640xf32, #tpu.memory_space<vmem>>, %arg15: memref<8x640xf32, #tpu.memory_space<vmem>>) attributes {dimension_semantics = [#tpu.dimension_semantics<parallel>], iteration_bounds = array<i64: 2>, scalar_prefetch = 0 : i64, scratch_operands = 3 : i64, tpu.core_type = #tpu.core_type<tc>, window_params = [{transform_indices = @transform_0, window_bounds = array<i64: 1, 8, 64>}, {transform_indices = @transform_1, window_bounds = array<i64: 1, 8, 640>}, {pipeline_mode = #tpu.pipeline_mode<synchronous>, transform_indices = @transform_2, window_bounds = array<i64: 64, 384>}, {pipeline_mode = #tpu.pipeline_mode<synchronous>, transform_indices = @transform_3, window_bounds = array<i64: 8, 128>}, {pipeline_mode = #tpu.pipeline_mode<synchronous>, transform_indices = @transform_4, window_bounds = array<i64: 8, 1>}, {pipeline_mode = #tpu.pipeline_mode<synchronous>, transform_indices = @transform_5, window_bounds = array<i64: 8, 72>}, {pipeline_mode = #tpu.pipeline_mode<synchronous>, transform_indices = @transform_6, window_bounds = array<i64: 8, 72>}, {pipeline_mode = #tpu.pipeline_mode<synchronous>, transform_indices = @transform_7, window_bounds = array<i64: 8, 1>}, {pipeline_mode = #tpu.pipeline_mode<synchronous>, transform_indices = @transform_8, window_bounds = array<i64: 4, 72>}, {pipeline_mode = #tpu.pipeline_mode<synchronous>, transform_indices = @transform_9, window_bounds = array<i64: 4, 1>}, {pipeline_mode = #tpu.pipeline_mode<synchronous>, transform_indices = @transform_10, window_bounds = array<i64: 1, 384>}, {transform_indices = @transform_11, window_bounds = array<i64: 1, 4, 384>}]} {
    %c0 = arith.constant 0 : index
    %c0_0 = arith.constant 0 : index
    %0 = vector.load %arg11[%c0, %c0_0] : memref<1x384xf32, #tpu.memory_space<vmem>>, vector<1x384xf32>
    %cst = arith.constant 0.000000e+00 : f32
    %1 = vector.broadcast %cst : f32 to vector<8x128xf32>
    %c0_1 = arith.constant 0 : index
    %c0_2 = arith.constant 0 : index
    %2 = vector.load %arg13[%c0_1, %c0_2] : memref<8x640xf32, #tpu.memory_space<vmem>>, vector<8x128xf32>
    tpu.vector_store %arg13[%c0_1, %c0_2], %1 {strides = array<i32>} : memref<8x640xf32, #tpu.memory_space<vmem>>, vector<8x128xf32>,
    %c0_3 = arith.constant 0 : index
    %c0_4 = arith.constant 0 : index
    %3 = vector.load %arg14[%c0_3, %c0_4] : memref<8x640xf32, #tpu.memory_space<vmem>>, vector<8x128xf32>
    tpu.vector_store %arg14[%c0_3, %c0_4], %1 {strides = array<i32>} : memref<8x640xf32, #tpu.memory_space<vmem>>, vector<8x128xf32>,
    %c0_5 = arith.constant 0 : index
    %c512 = arith.constant 512 : index
    %4 = vector.load %arg14[%c0_5, %c512] : memref<8x640xf32, #tpu.memory_space<vmem>>, vector<8x128xf32>
    tpu.vector_store %arg14[%c0_5, %c512], %1 {strides = array<i32>} : memref<8x640xf32, #tpu.memory_space<vmem>>, vector<8x128xf32>,
    %c0_6 = arith.constant 0 : index
    %c0_7 = arith.constant 0 : index
    %5 = vector.load %arg15[%c0_6, %c0_7] : memref<8x640xf32, #tpu.memory_space<vmem>>, vector<8x128xf32>
    tpu.vector_store %arg15[%c0_6, %c0_7], %1 {strides = array<i32>} : memref<8x640xf32, #tpu.memory_space<vmem>>, vector<8x128xf32>,
    %c0_8 = arith.constant 0 : index
    %c512_9 = arith.constant 512 : index
    %6 = vector.load %arg15[%c0_8, %c512_9] : memref<8x640xf32, #tpu.memory_space<vmem>>, vector<8x128xf32>
    tpu.vector_store %arg15[%c0_8, %c512_9], %1 {strides = array<i32>} : memref<8x640xf32, #tpu.memory_space<vmem>>, vector<8x128xf32>,
    %c0_10 = arith.constant 0 : index
    %c0_11 = arith.constant 0 : index
    %c0_12 = arith.constant 0 : index
    %7 = vector.load %arg1[%c0_10, %c0_11, %c0_12] : memref<1x8x64xf32, #tpu.memory_space<vmem>>, vector<1x8x64xf32>
    %8 = vector.shape_cast %7 : vector<1x8x64xf32> to vector<8x64xf32>
    %c0_13 = arith.constant 0 : index
    %c0_14 = arith.constant 0 : index
    %9 = vector.load %arg3[%c0_13, %c0_14] : memref<64x384xf32, #tpu.memory_space<vmem>>, vector<64x384xf32>
    %cst_15 = arith.constant dense<0.000000e+00> : vector<8x384xf32>
    %10 = tpu.matmul %8, %9, %cst_15 {dimension_numbers = #tpu.dot_dimension_numbers<[1], [0], [0], [1], [0, 0, 1, 1], [], []>} : vector<8x64xf32>, vector<64x384xf32>, vector<8x384xf32> -> vector<8x384xf32>
    %c0_16 = arith.constant 0 : index
    %c128 = arith.constant 128 : index
    %11 = vector.load %arg13[%c0_16, %c128] : memref<8x640xf32, #tpu.memory_space<vmem>>, vector<8x384xf32>
    tpu.vector_store %arg13[%c0_16, %c128], %10 {strides = array<i32>} : memref<8x640xf32, #tpu.memory_space<vmem>>, vector<8x384xf32>,
    %c0_17 = arith.constant 0 : index
    %c0_18 = arith.constant 0 : index
    %12 = vector.load %arg5[%c0_17, %c0_18] : memref<8x1xf32, #tpu.memory_space<vmem>>, vector<8x1xf32>
    %13 = vector.shape_cast %12 : vector<8x1xf32> to vector<8x1xf32>
    %14 = vector.broadcast %13 : vector<8x1xf32> to vector<8x384xf32>
    %c0_19 = arith.constant 0 : index
    %c0_20 = arith.constant 0 : index
    %15 = vector.load %arg4[%c0_19, %c0_20] : memref<8x128xf32, #tpu.memory_space<vmem>>, vector<8x32xf32>
    %c0_21 = arith.constant 0 : index
    %c71 = arith.constant 71 : index
    %16 = vector.load %arg13[%c0_21, %c71] : memref<8x640xf32, #tpu.memory_space<vmem>>, vector<8x384xf32>
    %c0_22 = arith.constant 0 : index
    %c73 = arith.constant 73 : index
    %17 = vector.load %arg13[%c0_22, %c73] : memref<8x640xf32, #tpu.memory_space<vmem>>, vector<8x384xf32>
    %c0_23 = arith.constant 0 : index
    %c107 = arith.constant 107 : index
    %18 = vector.load %arg13[%c0_23, %c107] : memref<8x640xf32, #tpu.memory_space<vmem>>, vector<8x384xf32>
    %c0_24 = arith.constant 0 : index
    %c109 = arith.constant 109 : index
    %19 = vector.load %arg13[%c0_24, %c109] : memref<8x640xf32, #tpu.memory_space<vmem>>, vector<8x384xf32>
    %20 = tpu.concatenate %16, %17, %18, %19 in 0 : vector<8x384xf32>, vector<8x384xf32>, vector<8x384xf32>, vector<8x384xf32> -> vector<32x384xf32>
    %cst_25 = arith.constant dense<0.000000e+00> : vector<8x384xf32>
    %21 = tpu.matmul %15, %20, %cst_25 {dimension_numbers = #tpu.dot_dimension_numbers<[1], [0], [0], [1], [0, 0, 1, 1], [], []>} : vector<8x32xf32>, vector<32x384xf32>, vector<8x384xf32> -> vector<8x384xf32>
    %22 = arith.addf %14, %21 : vector<8x384xf32>
    %c0_26 = arith.constant 0 : index
    %c32 = arith.constant 32 : index
    %23 = vector.load %arg4[%c0_26, %c32] : memref<8x128xf32, #tpu.memory_space<vmem>>, vector<8x32xf32>
    %c0_27 = arith.constant 0 : index
    %c72 = arith.constant 72 : index
    %24 = vector.load %arg13[%c0_27, %c72] : memref<8x640xf32, #tpu.memory_space<vmem>>, vector<8x384xf32>
    %c0_28 = arith.constant 0 : index
    %c74 = arith.constant 74 : index
    %25 = vector.load %arg13[%c0_28, %c74] : memref<8x640xf32, #tpu.memory_space<vmem>>, vector<8x384xf32>
    %c0_29 = arith.constant 0 : index
    %c108 = arith.constant 108 : index
    %26 = vector.load %arg13[%c0_29, %c108] : memref<8x640xf32, #tpu.memory_space<vmem>>, vector<8x384xf32>
    %c0_30 = arith.constant 0 : index
    %c110 = arith.constant 110 : index
    %27 = vector.load %arg13[%c0_30, %c110] : memref<8x640xf32, #tpu.memory_space<vmem>>, vector<8x384xf32>
    %28 = tpu.concatenate %24, %25, %26, %27 in 0 : vector<8x384xf32>, vector<8x384xf32>, vector<8x384xf32>, vector<8x384xf32> -> vector<32x384xf32>
    %cst_31 = arith.constant dense<0.000000e+00> : vector<8x384xf32>
    %29 = tpu.matmul %23, %28, %cst_31 {dimension_numbers = #tpu.dot_dimension_numbers<[1], [0], [0], [1], [0, 0, 1, 1], [], []>} : vector<8x32xf32>, vector<32x384xf32>, vector<8x384xf32> -> vector<8x384xf32>
    %30 = arith.addf %22, %29 : vector<8x384xf32>
    %c0_32 = arith.constant 0 : index
    %c64 = arith.constant 64 : index
    %31 = vector.load %arg4[%c0_32, %c64] : memref<8x128xf32, #tpu.memory_space<vmem>>, vector<8x32xf32>
    %c0_33 = arith.constant 0 : index
    %c89 = arith.constant 89 : index
    %32 = vector.load %arg13[%c0_33, %c89] : memref<8x640xf32, #tpu.memory_space<vmem>>, vector<8x384xf32>
    %c0_34 = arith.constant 0 : index
    %c91 = arith.constant 91 : index
    %33 = vector.load %arg13[%c0_34, %c91] : memref<8x640xf32, #tpu.memory_space<vmem>>, vector<8x384xf32>
    %c0_35 = arith.constant 0 : index
    %c125 = arith.constant 125 : index
    %34 = vector.load %arg13[%c0_35, %c125] : memref<8x640xf32, #tpu.memory_space<vmem>>, vector<8x384xf32>
    %c0_36 = arith.constant 0 : index
    %c127 = arith.constant 127 : index
    %35 = vector.load %arg13[%c0_36, %c127] : memref<8x640xf32, #tpu.memory_space<vmem>>, vector<8x384xf32>
    %36 = tpu.concatenate %32, %33, %34, %35 in 0 : vector<8x384xf32>, vector<8x384xf32>, vector<8x384xf32>, vector<8x384xf32> -> vector<32x384xf32>
    %cst_37 = arith.constant dense<0.000000e+00> : vector<8x384xf32>
    %37 = tpu.matmul %31, %36, %cst_37 {dimension_numbers = #tpu.dot_dimension_numbers<[1], [0], [0], [1], [0, 0, 1, 1], [], []>} : vector<8x32xf32>, vector<32x384xf32>, vector<8x384xf32> -> vector<8x384xf32>
    %38 = arith.addf %30, %37 : vector<8x384xf32>
    %c0_38 = arith.constant 0 : index
    %c96 = arith.constant 96 : index
    %39 = vector.load %arg4[%c0_38, %c96] : memref<8x128xf32, #tpu.memory_space<vmem>>, vector<8x32xf32>
    %c0_39 = arith.constant 0 : index
    %c90 = arith.constant 90 : index
    %40 = vector.load %arg13[%c0_39, %c90] : memref<8x640xf32, #tpu.memory_space<vmem>>, vector<8x384xf32>
    %c0_40 = arith.constant 0 : index
    %c92 = arith.constant 92 : index
    %41 = vector.load %arg13[%c0_40, %c92] : memref<8x640xf32, #tpu.memory_space<vmem>>, vector<8x384xf32>
    %c0_41 = arith.constant 0 : index
    %c126 = arith.constant 126 : index
    %42 = vector.load %arg13[%c0_41, %c126] : memref<8x640xf32, #tpu.memory_space<vmem>>, vector<8x384xf32>
    %c0_42 = arith.constant 0 : index
    %c128_43 = arith.constant 128 : index
    %43 = vector.load %arg13[%c0_42, %c128_43] : memref<8x640xf32, #tpu.memory_space<vmem>>, vector<8x384xf32>
    %44 = tpu.concatenate %40, %41, %42, %43 in 0 : vector<8x384xf32>, vector<8x384xf32>, vector<8x384xf32>, vector<8x384xf32> -> vector<32x384xf32>
    %cst_44 = arith.constant dense<0.000000e+00> : vector<8x384xf32>
    %45 = tpu.matmul %39, %44, %cst_44 {dimension_numbers = #tpu.dot_dimension_numbers<[1], [0], [0], [1], [0, 0, 1, 1], [], []>} : vector<8x32xf32>, vector<32x384xf32>, vector<8x384xf32> -> vector<8x384xf32>
    %46 = arith.addf %38, %45 : vector<8x384xf32>
    %47 = vector.broadcast %0 : vector<1x384xf32> to vector<8x384xf32>
    %48 = arith.mulf %46, %47 : vector<8x384xf32>
    %c0_45 = arith.constant 0 : index
    %c128_46 = arith.constant 128 : index
    %49 = vector.load %arg14[%c0_45, %c128_46] : memref<8x640xf32, #tpu.memory_space<vmem>>, vector<8x384xf32>
    tpu.vector_store %arg14[%c0_45, %c128_46], %48 {strides = array<i32>} : memref<8x640xf32, #tpu.memory_space<vmem>>, vector<8x384xf32>,
    %c0_47 = arith.constant 0 : index
    %c0_48 = arith.constant 0 : index
    %50 = vector.load %arg8[%c0_47, %c0_48] : memref<8x1xf32, #tpu.memory_space<vmem>>, vector<8x1xf32>
    %51 = vector.shape_cast %50 : vector<8x1xf32> to vector<8x1xf32>
    %52 = vector.broadcast %51 : vector<8x1xf32> to vector<8x384xf32>
    %c0_49 = arith.constant 0 : index
    %c0_50 = arith.constant 0 : index
    %53 = vector.load %arg6[%c0_49, %c0_50] : memref<8x72xf32, #tpu.memory_space<vmem>>, vector<8x72xf32>
    %c0_51 = arith.constant 0 : index
    %c109_52 = arith.constant 109 : index
    %54 = vector.load %arg14[%c0_51, %c109_52] : memref<8x640xf32, #tpu.memory_space<vmem>>, vector<8x384xf32>
    %c0_53 = arith.constant 0 : index
    %c110_54 = arith.constant 110 : index
    %55 = vector.load %arg14[%c0_53, %c110_54] : memref<8x640xf32, #tpu.memory_space<vmem>>, vector<8x384xf32>
    %c0_55 = arith.constant 0 : index
    %c111 = arith.constant 111 : index
    %56 = vector.load %arg14[%c0_55, %c111] : memref<8x640xf32, #tpu.memory_space<vmem>>, vector<8x384xf32>
    %c0_56 = arith.constant 0 : index
    %c127_57 = arith.constant 127 : index
    %57 = vector.load %arg14[%c0_56, %c127_57] : memref<8x640xf32, #tpu.memory_space<vmem>>, vector<8x384xf32>
    %c0_58 = arith.constant 0 : index
    %c128_59 = arith.constant 128 : index
    %58 = vector.load %arg14[%c0_58, %c128_59] : memref<8x640xf32, #tpu.memory_space<vmem>>, vector<8x384xf32>
    %c0_60 = arith.constant 0 : index
    %c129 = arith.constant 129 : index
    %59 = vector.load %arg14[%c0_60, %c129] : memref<8x640xf32, #tpu.memory_space<vmem>>, vector<8x384xf32>
    %c0_61 = arith.constant 0 : index
    %c145 = arith.constant 145 : index
    %60 = vector.load %arg14[%c0_61, %c145] : memref<8x640xf32, #tpu.memory_space<vmem>>, vector<8x384xf32>
    %c0_62 = arith.constant 0 : index
    %c146 = arith.constant 146 : index
    %61 = vector.load %arg14[%c0_62, %c146] : memref<8x640xf32, #tpu.memory_space<vmem>>, vector<8x384xf32>
    %c0_63 = arith.constant 0 : index
    %c147 = arith.constant 147 : index
    %62 = vector.load %arg14[%c0_63, %c147] : memref<8x640xf32, #tpu.memory_space<vmem>>, vector<8x384xf32>
    %63 = tpu.concatenate %54, %55, %56, %57, %58, %59, %60, %61, %62 in 0 : vector<8x384xf32>, vector<8x384xf32>, vector<8x384xf32>, vector<8x384xf32>, vector<8x384xf32>, vector<8x384xf32>, vector<8x384xf32>, vector<8x384xf32>, vector<8x384xf32> -> vector<72x384xf32>
    %cst_64 = arith.constant dense<0.000000e+00> : vector<8x384xf32>
    %64 = tpu.matmul %53, %63, %cst_64 {dimension_numbers = #tpu.dot_dimension_numbers<[1], [0], [0], [1], [0, 0, 1, 1], [], []>} : vector<8x72xf32>, vector<72x384xf32>, vector<8x384xf32> -> vector<8x384xf32>
    %65 = arith.addf %52, %64 : vector<8x384xf32>
    %c0_65 = arith.constant 0 : index
    %c0_66 = arith.constant 0 : index
    %66 = vector.load %arg7[%c0_65, %c0_66] : memref<8x72xf32, #tpu.memory_space<vmem>>, vector<8x72xf32>
    %c0_67 = arith.constant 0 : index
    %c0_68 = arith.constant 0 : index
    %c109_69 = arith.constant 109 : index
    %67 = vector.load %arg2[%c0_67, %c0_68, %c109_69] : memref<1x8x640xf32, #tpu.memory_space<vmem>>, vector<1x8x384xf32>
    %68 = vector.shape_cast %67 : vector<1x8x384xf32> to vector<8x384xf32>
    %c0_70 = arith.constant 0 : index
    %c0_71 = arith.constant 0 : index
    %c110_72 = arith.constant 110 : index
    %69 = vector.load %arg2[%c0_70, %c0_71, %c110_72] : memref<1x8x640xf32, #tpu.memory_space<vmem>>, vector<1x8x384xf32>
    %70 = vector.shape_cast %69 : vector<1x8x384xf32> to vector<8x384xf32>
    %c0_73 = arith.constant 0 : index
    %c0_74 = arith.constant 0 : index
    %c111_75 = arith.constant 111 : index
    %71 = vector.load %arg2[%c0_73, %c0_74, %c111_75] : memref<1x8x640xf32, #tpu.memory_space<vmem>>, vector<1x8x384xf32>
    %72 = vector.shape_cast %71 : vector<1x8x384xf32> to vector<8x384xf32>
    %c0_76 = arith.constant 0 : index
    %c0_77 = arith.constant 0 : index
    %c127_78 = arith.constant 127 : index
    %73 = vector.load %arg2[%c0_76, %c0_77, %c127_78] : memref<1x8x640xf32, #tpu.memory_space<vmem>>, vector<1x8x384xf32>
    %74 = vector.shape_cast %73 : vector<1x8x384xf32> to vector<8x384xf32>
    %c0_79 = arith.constant 0 : index
    %c0_80 = arith.constant 0 : index
    %c128_81 = arith.constant 128 : index
    %75 = vector.load %arg2[%c0_79, %c0_80, %c128_81] : memref<1x8x640xf32, #tpu.memory_space<vmem>>, vector<1x8x384xf32>
    %76 = vector.shape_cast %75 : vector<1x8x384xf32> to vector<8x384xf32>
    %c0_82 = arith.constant 0 : index
    %c0_83 = arith.constant 0 : index
    %c129_84 = arith.constant 129 : index
    %77 = vector.load %arg2[%c0_82, %c0_83, %c129_84] : memref<1x8x640xf32, #tpu.memory_space<vmem>>, vector<1x8x384xf32>
    %78 = vector.shape_cast %77 : vector<1x8x384xf32> to vector<8x384xf32>
    %c0_85 = arith.constant 0 : index
    %c0_86 = arith.constant 0 : index
    %c145_87 = arith.constant 145 : index
    %79 = vector.load %arg2[%c0_85, %c0_86, %c145_87] : memref<1x8x640xf32, #tpu.memory_space<vmem>>, vector<1x8x384xf32>
    %80 = vector.shape_cast %79 : vector<1x8x384xf32> to vector<8x384xf32>
    %c0_88 = arith.constant 0 : index
    %c0_89 = arith.constant 0 : index
    %c146_90 = arith.constant 146 : index
    %81 = vector.load %arg2[%c0_88, %c0_89, %c146_90] : memref<1x8x640xf32, #tpu.memory_space<vmem>>, vector<1x8x384xf32>
    %82 = vector.shape_cast %81 : vector<1x8x384xf32> to vector<8x384xf32>
    %c0_91 = arith.constant 0 : index
    %c0_92 = arith.constant 0 : index
    %c147_93 = arith.constant 147 : index
    %83 = vector.load %arg2[%c0_91, %c0_92, %c147_93] : memref<1x8x640xf32, #tpu.memory_space<vmem>>, vector<1x8x384xf32>
    %84 = vector.shape_cast %83 : vector<1x8x384xf32> to vector<8x384xf32>
    %85 = tpu.concatenate %68, %70, %72, %74, %76, %78, %80, %82, %84 in 0 : vector<8x384xf32>, vector<8x384xf32>, vector<8x384xf32>, vector<8x384xf32>, vector<8x384xf32>, vector<8x384xf32>, vector<8x384xf32>, vector<8x384xf32>, vector<8x384xf32> -> vector<72x384xf32>
    %cst_94 = arith.constant dense<0.000000e+00> : vector<8x384xf32>
    %86 = tpu.matmul %66, %85, %cst_94 {dimension_numbers = #tpu.dot_dimension_numbers<[1], [0], [0], [1], [0, 0, 1, 1], [], []>} : vector<8x72xf32>, vector<72x384xf32>, vector<8x384xf32> -> vector<8x384xf32>
    %87 = arith.addf %65, %86 : vector<8x384xf32>
    %cst_95 = arith.constant 0.000000e+00 : f32
    %88 = vector.broadcast %cst_95 : f32 to vector<8x384xf32>
    %89 = arith.maximumf %87, %88 : vector<8x384xf32>
    %90 = vector.broadcast %0 : vector<1x384xf32> to vector<8x384xf32>
    %91 = arith.mulf %89, %90 : vector<8x384xf32>
    %c0_96 = arith.constant 0 : index
    %c128_97 = arith.constant 128 : index
    %92 = vector.load %arg15[%c0_96, %c128_97] : memref<8x640xf32, #tpu.memory_space<vmem>>, vector<8x384xf32>
    tpu.vector_store %arg15[%c0_96, %c128_97], %91 {strides = array<i32>} : memref<8x640xf32, #tpu.memory_space<vmem>>, vector<8x384xf32>,
    %c0_98 = arith.constant 0 : index
    %c0_99 = arith.constant 0 : index
    %93 = vector.load %arg10[%c0_98, %c0_99] : memref<4x1xf32, #tpu.memory_space<vmem>>, vector<4x1xf32>
    %94 = vector.shape_cast %93 : vector<4x1xf32> to vector<4x1xf32>
    %95 = vector.broadcast %94 : vector<4x1xf32> to vector<4x384xf32>
    %c0_100 = arith.constant 0 : index
    %c0_101 = arith.constant 0 : index
    %96 = vector.load %arg9[%c0_100, %c0_101] : memref<4x72xf32, #tpu.memory_space<vmem>>, vector<4x72xf32>
    %c0_102 = arith.constant 0 : index
    %c109_103 = arith.constant 109 : index
    %97 = vector.load %arg15[%c0_102, %c109_103] : memref<8x640xf32, #tpu.memory_space<vmem>>, vector<8x384xf32>
    %c0_104 = arith.constant 0 : index
    %c110_105 = arith.constant 110 : index
    %98 = vector.load %arg15[%c0_104, %c110_105] : memref<8x640xf32, #tpu.memory_space<vmem>>, vector<8x384xf32>
    %c0_106 = arith.constant 0 : index
    %c111_107 = arith.constant 111 : index
    %99 = vector.load %arg15[%c0_106, %c111_107] : memref<8x640xf32, #tpu.memory_space<vmem>>, vector<8x384xf32>
    %c0_108 = arith.constant 0 : index
    %c127_109 = arith.constant 127 : index
    %100 = vector.load %arg15[%c0_108, %c127_109] : memref<8x640xf32, #tpu.memory_space<vmem>>, vector<8x384xf32>
    %c0_110 = arith.constant 0 : index
    %c128_111 = arith.constant 128 : index
    %101 = vector.load %arg15[%c0_110, %c128_111] : memref<8x640xf32, #tpu.memory_space<vmem>>, vector<8x384xf32>
    %c0_112 = arith.constant 0 : index
    %c129_113 = arith.constant 129 : index
    %102 = vector.load %arg15[%c0_112, %c129_113] : memref<8x640xf32, #tpu.memory_space<vmem>>, vector<8x384xf32>
    %c0_114 = arith.constant 0 : index
    %c145_115 = arith.constant 145 : index
    %103 = vector.load %arg15[%c0_114, %c145_115] : memref<8x640xf32, #tpu.memory_space<vmem>>, vector<8x384xf32>
    %c0_116 = arith.constant 0 : index
    %c146_117 = arith.constant 146 : index
    %104 = vector.load %arg15[%c0_116, %c146_117] : memref<8x640xf32, #tpu.memory_space<vmem>>, vector<8x384xf32>
    %c0_118 = arith.constant 0 : index
    %c147_119 = arith.constant 147 : index
    %105 = vector.load %arg15[%c0_118, %c147_119] : memref<8x640xf32, #tpu.memory_space<vmem>>, vector<8x384xf32>
    %106 = tpu.concatenate %97, %98, %99, %100, %101, %102, %103, %104, %105 in 0 : vector<8x384xf32>, vector<8x384xf32>, vector<8x384xf32>, vector<8x384xf32>, vector<8x384xf32>, vector<8x384xf32>, vector<8x384xf32>, vector<8x384xf32>, vector<8x384xf32> -> vector<72x384xf32>
    %cst_120 = arith.constant dense<0.000000e+00> : vector<4x384xf32>
    %107 = tpu.matmul %96, %106, %cst_120 {dimension_numbers = #tpu.dot_dimension_numbers<[1], [0], [0], [1], [0, 0, 1, 1], [], []>} : vector<4x72xf32>, vector<72x384xf32>, vector<4x384xf32> -> vector<4x384xf32>
    %108 = arith.addf %95, %107 : vector<4x384xf32>
    %cst_121 = arith.constant 0.000000e+00 : f32
    %109 = vector.broadcast %cst_121 : f32 to vector<4x384xf32>
    %110 = arith.maximumf %108, %109 : vector<4x384xf32>
    %c0_122 = arith.constant 0 : index
    %c0_123 = arith.constant 0 : index
    %c0_124 = arith.constant 0 : index
    %111 = vector.load %arg12[%c0_122, %c0_123, %c0_124] : memref<1x4x384xf32, #tpu.memory_space<vmem>>, vector<1x4x384xf32>
    %112 = vector.shape_cast %111 : vector<1x4x384xf32> to vector<4x384xf32>
    %113 = vector.shape_cast %110 : vector<4x384xf32> to vector<1x4x384xf32>
    tpu.vector_store %arg12[%c0_122, %c0_123, %c0_124], %113 {strides = array<i32>} : memref<1x4x384xf32, #tpu.memory_space<vmem>>, vector<1x4x384xf32>,
    return
  }
  func.func @transform_0(%arg0: i32) -> (i32, i32, i32) {
    %c0_i32 = arith.constant 0 : i32
    %c0_i32_0 = arith.constant 0 : i32
    %c0_i32_1 = arith.constant 0 : i32
    return %arg0, %c0_i32, %c0_i32_0 : i32, i32, i32
  }
  func.func @transform_1(%arg0: i32) -> (i32, i32, i32) {
    %c0_i32 = arith.constant 0 : i32
    %c0_i32_0 = arith.constant 0 : i32
    %c0_i32_1 = arith.constant 0 : i32
    return %arg0, %c0_i32, %c0_i32_0 : i32, i32, i32
  }
  func.func @transform_2(%arg0: i32) -> (i32, i32) {
    %c0_i32 = arith.constant 0 : i32
    %c0_i32_0 = arith.constant 0 : i32
    %c0_i32_1 = arith.constant 0 : i32
    return %c0_i32, %c0_i32_0 : i32, i32
  }
  func.func @transform_3(%arg0: i32) -> (i32, i32) {
    %c0_i32 = arith.constant 0 : i32
    %c0_i32_0 = arith.constant 0 : i32
    %c0_i32_1 = arith.constant 0 : i32
    return %c0_i32, %c0_i32_0 : i32, i32
  }
  func.func @transform_4(%arg0: i32) -> (i32, i32) {
    %c0_i32 = arith.constant 0 : i32
    %c0_i32_0 = arith.constant 0 : i32
    %c0_i32_1 = arith.constant 0 : i32
    return %c0_i32, %c0_i32_0 : i32, i32
  }
  func.func @transform_5(%arg0: i32) -> (i32, i32) {
    %c0_i32 = arith.constant 0 : i32
    %c0_i32_0 = arith.constant 0 : i32
    %c0_i32_1 = arith.constant 0 : i32
    return %c0_i32, %c0_i32_0 : i32, i32
  }
  func.func @transform_6(%arg0: i32) -> (i32, i32) {
    %c0_i32 = arith.constant 0 : i32
    %c0_i32_0 = arith.constant 0 : i32
    %c0_i32_1 = arith.constant 0 : i32
    return %c0_i32, %c0_i32_0 : i32, i32
  }
  func.func @transform_7(%arg0: i32) -> (i32, i32) {
    %c0_i32 = arith.constant 0 : i32
    %c0_i32_0 = arith.constant 0 : i32
    %c0_i32_1 = arith.constant 0 : i32
    return %c0_i32, %c0_i32_0 : i32, i32
  }
  func.func @transform_8(%arg0: i32) -> (i32, i32) {
    %c0_i32 = arith.constant 0 : i32
    %c0_i32_0 = arith.constant 0 : i32
    %c0_i32_1 = arith.constant 0 : i32
    return %c0_i32, %c0_i32_0 : i32, i32
  }
  func.func @transform_9(%arg0: i32) -> (i32, i32) {
    %c0_i32 = arith.constant 0 : i32
    %c0_i32_0 = arith.constant 0 : i32
    %c0_i32_1 = arith.constant 0 : i32
    return %c0_i32, %c0_i32_0 : i32, i32
  }
  func.func @transform_10(%arg0: i32) -> (i32, i32) {
    %c0_i32 = arith.constant 0 : i32
    %c0_i32_0 = arith.constant 0 : i32
    %c0_i32_1 = arith.constant 0 : i32
    return %c0_i32, %c0_i32_0 : i32, i32
  }
  func.func @transform_11(%arg0: i32) -> (i32, i32, i32) {
    %c0_i32 = arith.constant 0 : i32
    %c0_i32_0 = arith.constant 0 : i32
    %c0_i32_1 = arith.constant 0 : i32
    return %arg0, %c0_i32, %c0_i32_0 : i32, i32, i32
  }
}

</mosaic_0001>

<llo_original>
// kernel: tpu_custom_call.1
$region0: #{tpu_custom_call.1}
  #allocation0 [shape = 'u32[]', space=smem, size = 0x4, offset = 0x4, fixed_abs, tag = 'smem constant byte address 0x4 - core index']
  #allocation1 [shape = 'u32[72,128]{1,0:T(1,128)}', space=vmem, size = 0x9000, scoped, tag = 'internal scratch']
  #allocation2 [shape = 'f32[8,640]{1,0:T(8,128)}', space=vmem, size = 0x5000, scoped, tag = 'scratch operand']
  #allocation3 [shape = 'f32[8,640]{1,0:T(8,128)}', space=vmem, size = 0x5000, scoped, tag = 'scratch operand']
  #allocation4 [shape = 'f32[8,640]{1,0:T(8,128)}', space=vmem, size = 0x5000, scoped, tag = 'scratch operand']
  %s0 = inlined_call_operand.vmem [shape: f32[2,8,64], index: 0, kind: input, shape index: {}]
  %s1 = inlined_call_operand.hbm [shape: f32[2,8,640], index: 1, kind: input, shape index: {}]
  %s2 = inlined_call_operand.hbm [shape: f32[64,384], index: 2, kind: input, shape index: {}]
  %s3 = inlined_call_operand.hbm [shape: f32[8,128], index: 3, kind: input, shape index: {}]
  %s4 = inlined_call_operand.vmem [shape: f32[8,1], index: 4, kind: input, shape index: {}]
  %s5 = inlined_call_operand.hbm [shape: f32[8,72], index: 5, kind: input, shape index: {}]
  %s6 = inlined_call_operand.hbm [shape: f32[8,72], index: 6, kind: input, shape index: {}]
  %s7 = inlined_call_operand.vmem [shape: f32[8,1], index: 7, kind: input, shape index: {}]
  %s8 = inlined_call_operand.vmem [shape: f32[4,72], index: 8, kind: input, shape index: {}]
  %s9 = inlined_call_operand.vmem [shape: f32[4,1], index: 9, kind: input, shape index: {}]
  %s10 = inlined_call_operand.vmem [shape: f32[1,384], index: 10, kind: input, shape index: {}]
  %s11 = inlined_call_operand.hbm [shape: f32[2,4,384], index: 11, kind: output, shape index: {}]
  %s12 = sld [smem:[#allocation0]]
  $region97: #{tpu_custom_call.1} parent=0
    _
  %s14 = ssub.s32 1, %s12
  %s15 = scalar_select 0, %s14, %s12
  $region1: #{tpu_custom_call.1} parent=0
    #allocation5 [shape = 'u8[40960]{0}', space=vmem, size = 0xa000, scoped, tag = 'input window, operand 1']
    #allocation6 [shape = 's32[2]{0}', space=sflag, size = 0x8, scoped, tag = 'scoped memory for tpu_custom_call.1']
    #allocation7 [shape = 's32[2]{0}', space=sflag, size = 0x8, scoped, tag = 'scoped memory for tpu_custom_call.1']
    #allocation8 [shape = 'u8[98304]{0}', space=vmem, size = 0x18000, scoped, tag = 'input window, operand 2, single buffered']
    #allocation9 [shape = 's32[1]{0}', space=sflag, size = 0x4, scoped, tag = 'scoped memory for tpu_custom_call.1']
    #allocation10 [shape = 'u8[4096]{0}', space=vmem, size = 0x1000, scoped, tag = 'input window, operand 3, single buffered']
    #allocation11 [shape = 'u8[4096]{0}', space=vmem, size = 0x1000, scoped, tag = 'input window, operand 5, single buffered']
    #allocation12 [shape = 's32[1]{0}', space=sflag, size = 0x4, scoped, tag = 'scoped memory for tpu_custom_call.1']
    #allocation13 [shape = 'u8[4096]{0}', space=vmem, size = 0x1000, scoped, tag = 'input window, operand 6, single buffered']
    #allocation14 [shape = 'u8[12288]{0}', space=vmem, size = 0x3000, scoped, tag = 'output window, operand 0']
    %16 = vsyncpa [#allocation6], 0
    %s17 = scalar_lea.sflag [#allocation6], 1
    %18 = vsyncpa %s17, 0
    %19 = vsyncpa [#allocation9], 0
    %20 = vsyncpa [#allocation12], 0
    %21 = vsyncpa [#allocation7], 0
    %s22 = scalar_lea.sflag [#allocation7], 1
    %23 = vsyncpa %s22, 0
    loop: start=0, step=1, limit=4
    $region2: #{tpu_custom_call.1} parent=1 // loop_pre_header
      _
    $region3: #{tpu_custom_call.1} parent=1 // loop_header
      %s25 = sphi 0, %s29
      %p26 = scmp.ge.s32.totalorder %s25, 4
      %s35 = sphi 0, %s37
      %s38 = sphi 0, %s35
      %s39 = sphi 0, %s38
      %s55 = sphi 0, %s39
      %s61 = sphi 0, %s63
      %s64 = sphi 0, %s61
      %s65 = sphi 0, %s64
      %s81 = sphi 0, %s65
      %s85 = sphi 0, %s85
      %s87 = sphi 0, %s85
      %s88 = sphi 0, %s87
      %s102 = sphi 0, %s88
      %s106 = sphi 0, %s106
      %s108 = sphi 0, %s106
      %s109 = sphi 0, %s108
      %s123 = sphi 0, %s109
      %s127 = sphi 0, %s127
      %s129 = sphi 0, %s127
      %s130 = sphi 0, %s129
      %s144 = sphi 0, %s130
      %s148 = sphi 0, %s148
      %s150 = sphi 0, %s148
      %s151 = sphi 0, %s150
      %s165 = sphi 0, %s151
      %s169 = sphi 0, %s169
      %s171 = sphi 0, %s169
      %s172 = sphi 0, %s171
      %s186 = sphi 0, %s172
      %s190 = sphi 0, %s190
      %s192 = sphi 0, %s190
      %s193 = sphi 0, %s192
      %s207 = sphi 0, %s193
      %s211 = sphi 0, %s211
      %s213 = sphi 0, %s211
      %s214 = sphi 0, %s213
      %s228 = sphi 0, %s214
      %s232 = sphi 0, %s232
      %s234 = sphi 0, %s232
      %s235 = sphi 0, %s234
      %s249 = sphi 0, %s235
      %s253 = sphi 0, %s253
      %s255 = sphi 0, %s253
      %s256 = sphi 0, %s255
      %s270 = sphi 0, %s256
      %s276 = sphi 0, %s278
      %s279 = sphi 0, %s276
      %s280 = sphi 0, %s279
      %s296 = sphi 0, %s280
    $region4: #{tpu_custom_call.1} parent=1 // loop_header_branch
      %28 = sbr.rel (%p26) target = $region8
    $region5: #{tpu_custom_call.1} parent=1 // loop_body
      %s30 = ssub.s32 %s25, 1
      %s31 = ssub.s32 %s25, 2
      %s32 = sadd.s32 %s25, 1
      %s33 = ssub.s32 %s25, %s32
      %p34 = scmp.eq.s32.totalorder %s33, 0
      %s36 = sadd.s32 %s35, 1
      %s37 = scalar_select %p34, %s35, %s36
      %p40 = pneg %p34
      %p41 = scmp.eq.s32.totalorder %s25, 1
      %p42 = por %p40, %p41
      %p43 = scmp.ne.s32.totalorder %s35, %s38
      %p44 = scmp.eq.s32.totalorder %s25, 0
      %p45 = por %p43, %p44
      %p46 = scmp.ne.s32.totalorder %s35, %s38
      %p47 = scmp.eq.s32.totalorder %s30, 1
      %p48 = por %p46, %p47
      %p49 = scmp.ne.s32.totalorder %s38, %s39
      %p50 = scmp.eq.s32.totalorder %s30, 0
      %p51 = por %p49, %p50
      %p52 = scmp.ne.s32.totalorder %s38, %s39
      %p53 = scmp.eq.s32.totalorder %s31, 1
      %p54 = por %p52, %p53
      %p56 = scmp.ne.s32.totalorder %s39, %s55
      %p57 = scmp.eq.s32.totalorder %s31, 0
      %p58 = por %p56, %p57
      %s59 = ssub.s32 %s25, %s32
      %p60 = scmp.eq.s32.totalorder %s59, 0
      %s62 = sadd.s32 %s61, 1
      %s63 = scalar_select %p60, %s61, %s62
      %p66 = pneg %p60
      %p67 = scmp.eq.s32.totalorder %s25, 1
      %p68 = por %p66, %p67
      %p69 = scmp.ne.s32.totalorder %s61, %s64
      %p70 = scmp.eq.s32.totalorder %s25, 0
      %p71 = por %p69, %p70
      %p72 = scmp.ne.s32.totalorder %s61, %s64
      %p73 = scmp.eq.s32.totalorder %s30, 1
      %p74 = por %p72, %p73
      %p75 = scmp.ne.s32.totalorder %s64, %s65
      %p76 = scmp.eq.s32.totalorder %s30, 0
      %p77 = por %p75, %p76
      %p78 = scmp.ne.s32.totalorder %s64, %s65
      %p79 = scmp.eq.s32.totalorder %s31, 1
      %p80 = por %p78, %p79
      %p82 = scmp.ne.s32.totalorder %s65, %s81
      %p83 = scmp.eq.s32.totalorder %s31, 0
      %p84 = por %p82, %p83
      %s86 = sadd.s32 %s85, 1
      %p89 = scmp.eq.s32.totalorder %s25, 1
      %p90 = scmp.ne.s32.totalorder %s85, %s87
      %p91 = scmp.eq.s32.totalorder %s25, 0
      %p92 = por %p90, %p91
      %p93 = scmp.ne.s32.totalorder %s85, %s87
      %p94 = scmp.eq.s32.totalorder %s30, 1
      %p95 = por %p93, %p94
      %p96 = scmp.ne.s32.totalorder %s87, %s88
      %p97 = scmp.eq.s32.totalorder %s30, 0
      %p98 = por %p96, %p97
      %p99 = scmp.ne.s32.totalorder %s87, %s88
      %p100 = scmp.eq.s32.totalorder %s31, 1
      %p101 = por %p99, %p100
      %p103 = scmp.ne.s32.totalorder %s88, %s102
      %p104 = scmp.eq.s32.totalorder %s31, 0
      %p105 = por %p103, %p104
      %s107 = sadd.s32 %s106, 1
      %p110 = scmp.eq.s32.totalorder %s25, 1
      %p111 = scmp.ne.s32.totalorder %s106, %s108
      %p112 = scmp.eq.s32.totalorder %s25, 0
      %p113 = por %p111, %p112
      %p114 = scmp.ne.s32.totalorder %s106, %s108
      %p115 = scmp.eq.s32.totalorder %s30, 1
      %p116 = por %p114, %p115
      %p117 = scmp.ne.s32.totalorder %s108, %s109
      %p118 = scmp.eq.s32.totalorder %s30, 0
      %p119 = por %p117, %p118
      %p120 = scmp.ne.s32.totalorder %s108, %s109
      %p121 = scmp.eq.s32.totalorder %s31, 1
      %p122 = por %p120, %p121
      %p124 = scmp.ne.s32.totalorder %s109, %s123
      %p125 = scmp.eq.s32.totalorder %s31, 0
      %p126 = por %p124, %p125
      %s128 = sadd.s32 %s127, 1
      %p131 = scmp.eq.s32.totalorder %s25, 1
      %p132 = scmp.ne.s32.totalorder %s127, %s129
      %p133 = scmp.eq.s32.totalorder %s25, 0
      %p134 = por %p132, %p133
      %p135 = scmp.ne.s32.totalorder %s127, %s129
      %p136 = scmp.eq.s32.totalorder %s30, 1
      %p137 = por %p135, %p136
      %p138 = scmp.ne.s32.totalorder %s129, %s130
      %p139 = scmp.eq.s32.totalorder %s30, 0
      %p140 = por %p138, %p139
      %p141 = scmp.ne.s32.totalorder %s129, %s130
      %p142 = scmp.eq.s32.totalorder %s31, 1
      %p143 = por %p141, %p142
      %p145 = scmp.ne.s32.totalorder %s130, %s144
      %p146 = scmp.eq.s32.totalorder %s31, 0
      %p147 = por %p145, %p146
      %s149 = sadd.s32 %s148, 1
      %p152 = scmp.eq.s32.totalorder %s25, 1
      %p153 = scmp.ne.s32.totalorder %s148, %s150
      %p154 = scmp.eq.s32.totalorder %s25, 0
      %p155 = por %p153, %p154
      %p156 = scmp.ne.s32.totalorder %s148, %s150
      %p157 = scmp.eq.s32.totalorder %s30, 1
      %p158 = por %p156, %p157
      %p159 = scmp.ne.s32.totalorder %s150, %s151
      %p160 = scmp.eq.s32.totalorder %s30, 0
      %p161 = por %p159, %p160
      %p162 = scmp.ne.s32.totalorder %s150, %s151
      %p163 = scmp.eq.s32.totalorder %s31, 1
      %p164 = por %p162, %p163
      %p166 = scmp.ne.s32.totalorder %s151, %s165
      %p167 = scmp.eq.s32.totalorder %s31, 0
      %p168 = por %p166, %p167
      %s170 = sadd.s32 %s169, 1
      %p173 = scmp.eq.s32.totalorder %s25, 1
      %p174 = scmp.ne.s32.totalorder %s169, %s171
      %p175 = scmp.eq.s32.totalorder %s25, 0
      %p176 = por %p174, %p175
      %p177 = scmp.ne.s32.totalorder %s169, %s171
      %p178 = scmp.eq.s32.totalorder %s30, 1
      %p179 = por %p177, %p178
      %p180 = scmp.ne.s32.totalorder %s171, %s172
      %p181 = scmp.eq.s32.totalorder %s30, 0
      %p182 = por %p180, %p181
      %p183 = scmp.ne.s32.totalorder %s171, %s172
      %p184 = scmp.eq.s32.totalorder %s31, 1
      %p185 = por %p183, %p184
      %p187 = scmp.ne.s32.totalorder %s172, %s186
      %p188 = scmp.eq.s32.totalorder %s31, 0
      %p189 = por %p187, %p188
      %s191 = sadd.s32 %s190, 1
      %p194 = scmp.eq.s32.totalorder %s25, 1
      %p195 = scmp.ne.s32.totalorder %s190, %s192
      %p196 = scmp.eq.s32.totalorder %s25, 0
      %p197 = por %p195, %p196
      %p198 = scmp.ne.s32.totalorder %s190, %s192
      %p199 = scmp.eq.s32.totalorder %s30, 1
      %p200 = por %p198, %p199
      %p201 = scmp.ne.s32.totalorder %s192, %s193
      %p202 = scmp.eq.s32.totalorder %s30, 0
      %p203 = por %p201, %p202
      %p204 = scmp.ne.s32.totalorder %s192, %s193
      %p205 = scmp.eq.s32.totalorder %s31, 1
      %p206 = por %p204, %p205
      %p208 = scmp.ne.s32.totalorder %s193, %s207
      %p209 = scmp.eq.s32.totalorder %s31, 0
      %p210 = por %p208, %p209
      %s212 = sadd.s32 %s211, 1
      %p215 = scmp.eq.s32.totalorder %s25, 1
      %p216 = scmp.ne.s32.totalorder %s211, %s213
      %p217 = scmp.eq.s32.totalorder %s25, 0
      %p218 = por %p216, %p217
      %p219 = scmp.ne.s32.totalorder %s211, %s213
      %p220 = scmp.eq.s32.totalorder %s30, 1
      %p221 = por %p219, %p220
      %p222 = scmp.ne.s32.totalorder %s213, %s214
      %p223 = scmp.eq.s32.totalorder %s30, 0
      %p224 = por %p222, %p223
      %p225 = scmp.ne.s32.totalorder %s213, %s214
      %p226 = scmp.eq.s32.totalorder %s31, 1
      %p227 = por %p225, %p226
      %p229 = scmp.ne.s32.totalorder %s214, %s228
      %p230 = scmp.eq.s32.totalorder %s31, 0
      %p231 = por %p229, %p230
      %s233 = sadd.s32 %s232, 1
      %p236 = scmp.eq.s32.totalorder %s25, 1
      %p237 = scmp.ne.s32.totalorder %s232, %s234
      %p238 = scmp.eq.s32.totalorder %s25, 0
      %p239 = por %p237, %p238
      %p240 = scmp.ne.s32.totalorder %s232, %s234
      %p241 = scmp.eq.s32.totalorder %s30, 1
      %p242 = por %p240, %p241
      %p243 = scmp.ne.s32.totalorder %s234, %s235
      %p244 = scmp.eq.s32.totalorder %s30, 0
      %p245 = por %p243, %p244
      %p246 = scmp.ne.s32.totalorder %s234, %s235
      %p247 = scmp.eq.s32.totalorder %s31, 1
      %p248 = por %p246, %p247
      %p250 = scmp.ne.s32.totalorder %s235, %s249
      %p251 = scmp.eq.s32.totalorder %s31, 0
      %p252 = por %p250, %p251
      %s254 = sadd.s32 %s253, 1
      %p257 = scmp.eq.s32.totalorder %s25, 1
      %p258 = scmp.ne.s32.totalorder %s253, %s255
      %p259 = scmp.eq.s32.totalorder %s25, 0
      %p260 = por %p258, %p259
      %p261 = scmp.ne.s32.totalorder %s253, %s255
      %p262 = scmp.eq.s32.totalorder %s30, 1
      %p263 = por %p261, %p262
      %p264 = scmp.ne.s32.totalorder %s255, %s256
      %p265 = scmp.eq.s32.totalorder %s30, 0
      %p266 = por %p264, %p265
      %p267 = scmp.ne.s32.totalorder %s255, %s256
      %p268 = scmp.eq.s32.totalorder %s31, 1
      %p269 = por %p267, %p268
      %p271 = scmp.ne.s32.totalorder %s256, %s270
      %p272 = scmp.eq.s32.totalorder %s31, 0
      %p273 = por %p271, %p272
      %s274 = ssub.s32 %s25, %s32
      %p275 = scmp.eq.s32.totalorder %s274, 0
      %s277 = sadd.s32 %s276, 1
      %s278 = scalar_select %p275, %s276, %s277
      %p281 = pneg %p275
      %p282 = scmp.eq.s32.totalorder %s25, 1
      %p283 = por %p281, %p282
      %p284 = scmp.ne.s32.totalorder %s276, %s279
      %p285 = scmp.eq.s32.totalorder %s25, 0
      %p286 = por %p284, %p285
      %p287 = scmp.ne.s32.totalorder %s276, %s279
      %p288 = scmp.eq.s32.totalorder %s30, 1
      %p289 = por %p287, %p288
      %p290 = scmp.ne.s32.totalorder %s279, %s280
      %p291 = scmp.eq.s32.totalorder %s30, 0
      %p292 = por %p290, %p291
      %p293 = scmp.ne.s32.totalorder %s279, %s280
      %p294 = scmp.eq.s32.totalorder %s31, 1
      %p295 = por %p293, %p294
      %p297 = scmp.ne.s32.totalorder %s280, %s296
      %p298 = scmp.eq.s32.totalorder %s31, 0
      %p299 = por %p297, %p298
      %p300 = scmp.le.s32.totalorder 1, %s25
      %p301 = scmp.lt.s32.totalorder %s25, 3
      %p302 = pnand %p300, %p301
      %p303 = pneg %p302
      // Predicated region
      $region9: #{tpu_custom_call.1} parent=5 // pred_check
        _
      $region10: #{tpu_custom_call.1} parent=5 // pred_check_branch
        %305 = sbr.rel (%p302) target = $region12
      $region11: #{tpu_custom_call.1} parent=5 // pred_region
        %s306 = ssub.s32 %s25, 1
        // Predicated region
        $region13: #{tpu_custom_call.1} parent=11 // pred_check
          %p307 = pneg %p98
        $region14: #{tpu_custom_call.1} parent=11 // pred_check_branch
          %309 = sbr.rel (%p307) target = $region16
        $region15: #{tpu_custom_call.1} parent=11 // pred_region
          %311 = vsyncadd [#allocation9], 0
          %s312 = sshll.u32 %s2, 4
          %s313 = int_to_ptr.hbm [resolvable:$true] %s312
          %s314 = sshll.u32 [#allocation8], 4
          %s315 = int_to_ptr.vmem [resolvable:$true] %s314
          %320 = dma.hbm_to_vmem [thread:$0]  %s313, 3072, %s315, [#allocation9], 384, 384, 24
        $region16: #{tpu_custom_call.1} parent=11 // pred_fallthru
          _
        // Predicated region
        $region17: #{tpu_custom_call.1} parent=11 // pred_check
          %p321 = pneg %p119
        $region18: #{tpu_custom_call.1} parent=11 // pred_check_branch
          %323 = sbr.rel (%p321) target = $region20
        $region19: #{tpu_custom_call.1} parent=11 // pred_region
          %325 = vsyncadd [#allocation9], 0
          %s327 = sshll.u32 %s3, 4
          %s328 = int_to_ptr.hbm [resolvable:$true] %s327
          %s329 = sshll.u32 [#allocation10], 4
          %s330 = int_to_ptr.vmem [resolvable:$true] %s329
          %332 = dma.hbm_to_vmem [thread:$0]  %s328, 128, %s330, [#allocation9]
        $region20: #{tpu_custom_call.1} parent=11 // pred_fallthru
          _
        // Predicated region
        $region21: #{tpu_custom_call.1} parent=11 // pred_check
          %p333 = pneg %p140
        $region22: #{tpu_custom_call.1} parent=11 // pred_check_branch
          %335 = sbr.rel (%p333) target = $region24
        $region23: #{tpu_custom_call.1} parent=11 // pred_region
          _
        $region24: #{tpu_custom_call.1} parent=11 // pred_fallthru
          _
        // Predicated region
        $region25: #{tpu_custom_call.1} parent=11 // pred_check
          %p336 = pneg %p161
        $region26: #{tpu_custom_call.1} parent=11 // pred_check_branch
          %338 = sbr.rel (%p336) target = $region28
        $region27: #{tpu_custom_call.1} parent=11 // pred_region
          %340 = vsyncadd [#allocation12], 0
          %s342 = sshll.u32 %s5, 4
          %s343 = int_to_ptr.hbm [resolvable:$true] %s342
          %s344 = sshll.u32 [#allocation11], 4
          %s345 = int_to_ptr.vmem [resolvable:$true] %s344
          %347 = dma.hbm_to_vmem [thread:$0]  %s343, 128, %s345, [#allocation12]
        $region28: #{tpu_custom_call.1} parent=11 // pred_fallthru
          _
        // Predicated region
        $region29: #{tpu_custom_call.1} parent=11 // pred_check
          %p348 = pneg %p182
        $region30: #{tpu_custom_call.1} parent=11 // pred_check_branch
          %350 = sbr.rel (%p348) target = $region32
        $region31: #{tpu_custom_call.1} parent=11 // pred_region
          %352 = vsyncadd [#allocation12], 0
          %s354 = sshll.u32 %s6, 4
          %s355 = int_to_ptr.hbm [resolvable:$true] %s354
          %s356 = sshll.u32 [#allocation13], 4
          %s357 = int_to_ptr.vmem [resolvable:$true] %s356
          %359 = dma.hbm_to_vmem [thread:$0]  %s355, 128, %s357, [#allocation12]
        $region32: #{tpu_custom_call.1} parent=11 // pred_fallthru
          _
        // Predicated region
        $region33: #{tpu_custom_call.1} parent=11 // pred_check
          %p360 = pneg %p203
        $region34: #{tpu_custom_call.1} parent=11 // pred_check_branch
          %362 = sbr.rel (%p360) target = $region36
        $region35: #{tpu_custom_call.1} parent=11 // pred_region
          _
        $region36: #{tpu_custom_call.1} parent=11 // pred_fallthru
          _
        // Predicated region
        $region37: #{tpu_custom_call.1} parent=11 // pred_check
          %p363 = pneg %p224
        $region38: #{tpu_custom_call.1} parent=11 // pred_check_branch
          %365 = sbr.rel (%p363) target = $region40
        $region39: #{tpu_custom_call.1} parent=11 // pred_region
          _
        $region40: #{tpu_custom_call.1} parent=11 // pred_fallthru
          _
        // Predicated region
        $region41: #{tpu_custom_call.1} parent=11 // pred_check
          %p366 = pneg %p245
        $region42: #{tpu_custom_call.1} parent=11 // pred_check_branch
          %368 = sbr.rel (%p366) target = $region44
        $region43: #{tpu_custom_call.1} parent=11 // pred_region
          _
        $region44: #{tpu_custom_call.1} parent=11 // pred_fallthru
          _
        // Predicated region
        $region45: #{tpu_custom_call.1} parent=11 // pred_check
          %p369 = pneg %p266
        $region46: #{tpu_custom_call.1} parent=11 // pred_check_branch
          %371 = sbr.rel (%p369) target = $region48
        $region47: #{tpu_custom_call.1} parent=11 // pred_region
          _
        $region48: #{tpu_custom_call.1} parent=11 // pred_fallthru
          _
      $region12: #{tpu_custom_call.1} parent=5 // pred_fallthru
        _
      %p372 = scmp.lt.s32.totalorder %s25, 2
      // Predicated region
      $region49: #{tpu_custom_call.1} parent=5 // pred_check
        %p373 = pneg %p372
      $region50: #{tpu_custom_call.1} parent=5 // pred_check_branch
        %375 = sbr.rel (%p373) target = $region52
      $region51: #{tpu_custom_call.1} parent=5 // pred_region
        // Predicated region
        $region53: #{tpu_custom_call.1} parent=51 // pred_check
          %p376 = pneg %p45
        $region54: #{tpu_custom_call.1} parent=51 // pred_check_branch
          %378 = sbr.rel (%p376) target = $region56
        $region55: #{tpu_custom_call.1} parent=51 // pred_region
          %p379 = scmp.lt.s32.totalorder %s25, 1
          %s380 = scalar_select %p379, %s25, 1
          %s381 = smul.addr %s380, 8
          %s382 = scalar_lea.vmem %s0, %s381
        $region56: #{tpu_custom_call.1} parent=51 // pred_fallthru
          _
        // Predicated region
        $region57: #{tpu_custom_call.1} parent=51 // pred_check
          %p383 = pneg %p71
        $region58: #{tpu_custom_call.1} parent=51 // pred_check_branch
          %385 = sbr.rel (%p383) target = $region60
        $region59: #{tpu_custom_call.1} parent=51 // pred_region
          %s386 = sand.u32 %s61, 1
          %s387 = scalar_lea.sflag [#allocation6], %s386
          %s388 = sand.u32 %s61, 1
          %s389 = smul.addr %s388, 40
          %s390 = scalar_lea.vmem [#allocation5], %s389
          %392 = vsyncadd %s387, 0
          %s393 = smul.addr %s25, 5
          %s394 = smul.addr %s393, 8
          %s395 = scalar_lea.hbm %s1, %s394
          %s397 = sshll.u32 %s395, 4
          %s398 = int_to_ptr.hbm [resolvable:$true] %s397
          %s399 = sshll.u32 %s390, 4
          %s400 = int_to_ptr.vmem [resolvable:$true] %s399
          %402 = dma.hbm_to_vmem [thread:$0]  %s398, 640, %s400, %s387
        $region60: #{tpu_custom_call.1} parent=51 // pred_fallthru
          _
      $region52: #{tpu_custom_call.1} parent=5 // pred_fallthru
        _
      %p403 = scmp.le.s32.totalorder 1, %s25
      %p404 = scmp.lt.s32.totalorder %s25, 3
      %p405 = pnand %p403, %p404
      %p406 = pneg %p405
      // Predicated region
      $region61: #{tpu_custom_call.1} parent=5 // pred_check
        _
      $region62: #{tpu_custom_call.1} parent=5 // pred_check_branch
        %408 = sbr.rel (%p405) target = $region64
      $region63: #{tpu_custom_call.1} parent=5 // pred_region
        %s409 = ssub.s32 %s25, 1
        %s410 = sand.u32 %s64, 1
        %s411 = scalar_lea.sflag [#allocation6], %s410
        %s412 = sand.u32 %s64, 1
        %s413 = smul.addr %s412, 40
        %s414 = scalar_lea.vmem [#allocation5], %s413
        // Predicated region
        $region65: #{tpu_custom_call.1} parent=63 // pred_check
          %p415 = pneg %p77
        $region66: #{tpu_custom_call.1} parent=63 // pred_check_branch
          %417 = sbr.rel (%p415) target = $region68
        $region67: #{tpu_custom_call.1} parent=63 // pred_region
          %419 = dma.done %s411, 640
        $region68: #{tpu_custom_call.1} parent=63 // pred_fallthru
          _
        // Predicated region
        $region69: #{tpu_custom_call.1} parent=63 // pred_check
          %p420 = pneg %p98
        $region70: #{tpu_custom_call.1} parent=63 // pred_check_branch
          %422 = sbr.rel (%p420) target = $region72
        $region71: #{tpu_custom_call.1} parent=63 // pred_region
          %424 = dma.done [#allocation9], 3072
        $region72: #{tpu_custom_call.1} parent=63 // pred_fallthru
          _
        // Predicated region
        $region73: #{tpu_custom_call.1} parent=63 // pred_check
          %p425 = pneg %p119
        $region74: #{tpu_custom_call.1} parent=63 // pred_check_branch
          %427 = sbr.rel (%p425) target = $region76
        $region75: #{tpu_custom_call.1} parent=63 // pred_region
          %429 = dma.done [#allocation9], 128
        $region76: #{tpu_custom_call.1} parent=63 // pred_fallthru
          _
        // Predicated region
        $region77: #{tpu_custom_call.1} parent=63 // pred_check
          %p430 = pneg %p161
        $region78: #{tpu_custom_call.1} parent=63 // pred_check_branch
          %432 = sbr.rel (%p430) target = $region80
        $region79: #{tpu_custom_call.1} parent=63 // pred_region
          %434 = dma.done [#allocation12], 128
        $region80: #{tpu_custom_call.1} parent=63 // pred_fallthru
          _
        // Predicated region
        $region81: #{tpu_custom_call.1} parent=63 // pred_check
          %p435 = pneg %p182
        $region82: #{tpu_custom_call.1} parent=63 // pred_check_branch
          %437 = sbr.rel (%p435) target = $region84
        $region83: #{tpu_custom_call.1} parent=63 // pred_region
          %439 = dma.done [#allocation12], 128
        $region84: #{tpu_custom_call.1} parent=63 // pred_fallthru
          _
        %p440 = scmp.lt.s32.totalorder %s30, 1
        %s441 = scalar_select %p440, %s30, 1
        %s442 = smul.addr %s441, 8
        %s443 = scalar_lea.vmem %s0, %s442
        %p444 = pneg %p51
        %p445 = pneg %p48
        %s446 = sand.u32 %s64, 1
        %s447 = scalar_lea.sflag [#allocation6], %s446
        %s448 = sand.u32 %s64, 1
        %s449 = smul.addr %s448, 40
        %s450 = scalar_lea.vmem [#allocation5], %s449
        %p451 = pneg %p77
        %p452 = pneg %p74
        %p453 = pneg %p98
        %p454 = pneg %p95
        %p455 = pneg %p119
        %p456 = pneg %p116
        %p457 = pneg %p140
        %p458 = pneg %p137
        %p459 = pneg %p161
        %p460 = pneg %p158
        %p461 = pneg %p182
        %p462 = pneg %p179
        %p463 = pneg %p203
        %p464 = pneg %p200
        %p465 = pneg %p224
        %p466 = pneg %p221
        %p467 = pneg %p245
        %p468 = pneg %p242
        %p469 = pneg %p266
        %p470 = pneg %p263
        %p471 = pneg %p292
        %p472 = pneg %p289
        %s473 = sand.u32 %s279, 1
        %s474 = scalar_lea.sflag [#allocation7], %s473
        %s475 = sand.u32 %s279, 1
        %s476 = smul.addr %s475, 12
        %s477 = scalar_lea.vmem [#allocation14], %s476
        %p478 = scmp.lt.s32.totalorder %s30, 1
        %s479 = scalar_select %p478, %s30, 1
        %s480 = smul.addr %s479, 8
        %s481 = scalar_lea.vmem %s0, %s480
        %v482 = vld [vmem:[%s10] sm:$0x7]
        %483 = vst [vmem:[#allocation2] sm:$0xff] 0.0
        %484 = vst [vmem:[#allocation3] sm:$0xff] 0.0
        %485 = vst [vmem:[#allocation3 + $0x20] sm:$0xff] 0.0
        %486 = vst [vmem:[#allocation4] sm:$0xff] 0.0
        %487 = vst [vmem:[#allocation4 + $0x20] sm:$0xff] 0.0
        %v488 = vld [vmem:[%s481] sm:$0xff]
        %v489 = vld [vmem:[#allocation8] sm:$0xff]
        %v490 = vld [vmem:[#allocation8 + $0x8] sm:$0xff]
        %v491 = vld [vmem:[#allocation8 + $0x10] sm:$0xff]
        %v492 = vld [vmem:[#allocation8 + $0x18] sm:$0xff]
        %v493 = vld [vmem:[#allocation8 + $0x20] sm:$0xff]
        %v494 = vld [vmem:[#allocation8 + $0x28] sm:$0xff]
        %v495 = vld [vmem:[#allocation8 + $0x30] sm:$0xff]
        %v496 = vld [vmem:[#allocation8 + $0x38] sm:$0xff]
        %v497 = vld [vmem:[#allocation8 + $0x40] sm:$0xff]
        %v498 = vld [vmem:[#allocation8 + $0x48] sm:$0xff]
        %v499 = vld [vmem:[#allocation8 + $0x50] sm:$0xff]
        %v500 = vld [vmem:[#allocation8 + $0x58] sm:$0xff]
        %v501 = vld [vmem:[#allocation8 + $0x60] sm:$0xff]
        %v502 = vld [vmem:[#allocation8 + $0x68] sm:$0xff]
        %v503 = vld [vmem:[#allocation8 + $0x70] sm:$0xff]
        %v504 = vld [vmem:[#allocation8 + $0x78] sm:$0xff]
        %v505 = vld [vmem:[#allocation8 + $0x80] sm:$0xff]
        %v506 = vld [vmem:[#allocation8 + $0x88] sm:$0xff]
        %v507 = vld [vmem:[#allocation8 + $0x90] sm:$0xff]
        %v508 = vld [vmem:[#allocation8 + $0x98] sm:$0xff]
        %v509 = vld [vmem:[#allocation8 + $0xa0] sm:$0xff]
        %v510 = vld [vmem:[#allocation8 + $0xa8] sm:$0xff]
        %v511 = vld [vmem:[#allocation8 + $0xb0] sm:$0xff]
        %v512 = vld [vmem:[#allocation8 + $0xb8] sm:$0xff]
        %vm513 = vcmask 523264
        %v515 = vsel %vm513, %v488, 0
        %517 = vmatpush.msra.mxu0 0.0
        %518 = vmatpush.msra.mxu0 0.0
        %519 = vmatpush.msra.mxu0 0.0
        %520 = vmatpush.msra.mxu0 0.0
        %521 = vmatpush.msra.mxu0 0.0
        %522 = vmatpush.msra.mxu0 0.0
        %523 = vmatpush.msra.mxu0 0.0
        %524 = vmatpush.msra.mxu0 0.0
        %525 = vmatpush.msra.mxu0 %v510
        %526 = vmatpush.msra.mxu0 %v507
        %527 = vmatpush.msra.mxu0 %v504
        %528 = vmatpush.msra.mxu0 %v501
        %529 = vmatpush.msra.mxu0 %v498
        %530 = vmatpush.msra.mxu0 %v495
        %531 = vmatpush.msra.mxu0 %v492
        %532 = vmatpush.msra.mxu0 %v489
        %533 = vmatmul.f32.gmra.mxu0 %v515
        %v534 = vpop.f32.mrf.mxu0
        %v535 = vadd.f32 0.0, %v534
        %536 = vdwg.mxu0
        %537 = vmatpush.msra.mxu0 0.0
        %538 = vmatpush.msra.mxu0 0.0
        %539 = vmatpush.msra.mxu0 0.0
        %540 = vmatpush.msra.mxu0 0.0
        %541 = vmatpush.msra.mxu0 0.0
        %542 = vmatpush.msra.mxu0 0.0
        %543 = vmatpush.msra.mxu0 0.0
        %544 = vmatpush.msra.mxu0 0.0
        %545 = vmatpush.msra.mxu0 %v511
        %546 = vmatpush.msra.mxu0 %v508
        %547 = vmatpush.msra.mxu0 %v505
        %548 = vmatpush.msra.mxu0 %v502
        %549 = vmatpush.msra.mxu0 %v499
        %550 = vmatpush.msra.mxu0 %v496
        %551 = vmatpush.msra.mxu0 %v493
        %552 = vmatpush.msra.mxu0 %v490
        %553 = vmatmul.f32.gmra.mxu0 %v515
        %v554 = vpop.f32.mrf.mxu0
        %v555 = vadd.f32 0.0, %v554
        %556 = vdwg.mxu0
        %557 = vmatpush.msra.mxu0 0.0
        %558 = vmatpush.msra.mxu0 0.0
        %559 = vmatpush.msra.mxu0 0.0
        %560 = vmatpush.msra.mxu0 0.0
        %561 = vmatpush.msra.mxu0 0.0
        %562 = vmatpush.msra.mxu0 0.0
        %563 = vmatpush.msra.mxu0 0.0
        %564 = vmatpush.msra.mxu0 0.0
        %565 = vmatpush.msra.mxu0 %v512
        %566 = vmatpush.msra.mxu0 %v509
        %567 = vmatpush.msra.mxu0 %v506
        %568 = vmatpush.msra.mxu0 %v503
        %569 = vmatpush.msra.mxu0 %v500
        %570 = vmatpush.msra.mxu0 %v497
        %571 = vmatpush.msra.mxu0 %v494
        %572 = vmatpush.msra.mxu0 %v491
        %573 = vmatmul.f32.gmra.mxu0 %v515
        %v574 = vpop.f32.mrf.mxu0
        %v575 = vadd.f32 0.0, %v574
        %576 = vdwg.mxu0
        %577 = vst [vmem:[#allocation2 + $0x8] sm:$0xff] %v535
        %578 = vst [vmem:[#allocation2 + $0x10] sm:$0xff] %v555
        %579 = vst [vmem:[#allocation2 + $0x18] sm:$0xff] %v575
        %v580 = vld [vmem:[%s4] sm:$0xff]
        %582 = vset.pattern.permute.xlu0 0
        %583 = vperm.xlu0 %582, %v580
        %v584 = vpop.permute.xlu0 %583
        %v586 = vld [vmem:[#allocation10] sm:$0xff]
        %v587 = vld [vmem:[#allocation2] sm:$0xff]
        %v588 = vld [vmem:[#allocation2 + $0x8] sm:$0xff]
        %v589 = vld [vmem:[#allocation2 + $0x10] sm:$0xff]
        %v590 = vld [vmem:[#allocation2 + $0x18] sm:$0xff]
        %595 = vrot.lane.b32.xlu0 %v587, 126
        %v596 = vpop.permute.xlu0 %595
        %597 = vrot.lane.b32.xlu0 %v588, 126
        %v598 = vpop.permute.xlu0 %597
        %599 = vrot.lane.b32.xlu0 %v589, 126
        %v600 = vpop.permute.xlu0 %599
        %601 = vrot.lane.b32.xlu0 %v590, 126
        %v602 = vpop.permute.xlu0 %601
        %vm603 = vcmask 1031168
        %v604 = vsel %vm603, %v596, %v598
        %v605 = vsel %vm603, %v598, %v600
        %v606 = vsel %vm603, %v600, %v602
        %607 = vrot.lane.b32.xlu0 %v587, 92
        %v608 = vpop.permute.xlu0 %607
        %609 = vrot.lane.b32.xlu0 %v588, 92
        %v610 = vpop.permute.xlu0 %609
        %611 = vrot.lane.b32.xlu0 %v589, 92
        %v612 = vpop.permute.xlu0 %611
        %613 = vrot.lane.b32.xlu0 %v590, 92
        %v614 = vpop.permute.xlu0 %613
        %vm615 = vcmask 752640
        %v616 = vsel %vm615, %v608, %v610
        %v617 = vsel %vm615, %v610, %v612
        %v618 = vsel %vm615, %v612, %v614
        %619 = vrot.lane.b32.xlu0 %v587, 90
        %v620 = vpop.permute.xlu0 %619
        %621 = vrot.lane.b32.xlu0 %v588, 90
        %v622 = vpop.permute.xlu0 %621
        %623 = vrot.lane.b32.xlu0 %v589, 90
        %v624 = vpop.permute.xlu0 %623
        %625 = vrot.lane.b32.xlu0 %v590, 90
        %v626 = vpop.permute.xlu0 %625
        %vm627 = vcmask 736256
        %v628 = vsel %vm627, %v620, %v622
        %v629 = vsel %vm627, %v622, %v624
        %v630 = vsel %vm627, %v624, %v626
        %631 = vrot.lane.b32.xlu0 %v587, 57
        %v632 = vpop.permute.xlu0 %631
        %633 = vrot.lane.b32.xlu0 %v588, 57
        %v634 = vpop.permute.xlu0 %633
        %635 = vrot.lane.b32.xlu0 %v589, 57
        %v636 = vpop.permute.xlu0 %635
        %637 = vrot.lane.b32.xlu0 %v590, 57
        %v638 = vpop.permute.xlu0 %637
        %639 = vrot.lane.b32.xlu0 %v604, 57
        %v640 = vpop.permute.xlu0 %639
        %641 = vrot.lane.b32.xlu0 %v605, 57
        %v642 = vpop.permute.xlu0 %641
        %643 = vrot.lane.b32.xlu0 %v606, 57
        %v644 = vpop.permute.xlu0 %643
        %645 = vrot.lane.b32.xlu0 %v602, 57
        %v646 = vpop.permute.xlu0 %645
        %647 = vrot.lane.b32.xlu0 %v616, 57
        %v648 = vpop.permute.xlu0 %647
        %649 = vrot.lane.b32.xlu0 %v617, 57
        %v650 = vpop.permute.xlu0 %649
        %651 = vrot.lane.b32.xlu0 %v618, 57
        %v652 = vpop.permute.xlu0 %651
        %653 = vrot.lane.b32.xlu0 %v614, 57
        %v654 = vpop.permute.xlu0 %653
        %655 = vrot.lane.b32.xlu0 %v628, 57
        %v656 = vpop.permute.xlu0 %655
        %657 = vrot.lane.b32.xlu0 %v629, 57
        %v658 = vpop.permute.xlu0 %657
        %659 = vrot.lane.b32.xlu0 %v630, 57
        %v660 = vpop.permute.xlu0 %659
        %661 = vrot.lane.b32.xlu0 %v626, 57
        %v662 = vpop.permute.xlu0 %661
        %vm663 = vcmask 465920
        %v664 = vsel %vm663, %v632, %v634
        %v665 = vsel %vm663, %v634, %v636
        %v666 = vsel %vm663, %v636, %v638
        %v667 = vsel %vm663, %v640, %v642
        %v668 = vsel %vm663, %v642, %v644
        %v669 = vsel %vm663, %v644, %v646
        %v670 = vsel %vm663, %v648, %v650
        %v671 = vsel %vm663, %v650, %v652
        %v672 = vsel %vm663, %v652, %v654
        %v673 = vsel %vm663, %v656, %v658
        %v674 = vsel %vm663, %v658, %v660
        %v675 = vsel %vm663, %v660, %v662
        %vm688 = vcmask 261120
        %v690 = vsel %vm688, %v586, 0
        %692 = vmatpush.msra.mxu0 0.0
        %693 = vmatpush.msra.mxu0 0.0
        %694 = vmatpush.msra.mxu0 0.0
        %695 = vmatpush.msra.mxu0 0.0
        %696 = vmatpush.msra.mxu0 0.0
        %697 = vmatpush.msra.mxu0 0.0
        %698 = vmatpush.msra.mxu0 0.0
        %699 = vmatpush.msra.mxu0 0.0
        %700 = vmatpush.msra.mxu0 0.0
        %701 = vmatpush.msra.mxu0 0.0
        %702 = vmatpush.msra.mxu0 0.0
        %703 = vmatpush.msra.mxu0 0.0
        %704 = vmatpush.msra.mxu0 %v673
        %705 = vmatpush.msra.mxu0 %v670
        %706 = vmatpush.msra.mxu0 %v667
        %707 = vmatpush.msra.mxu0 %v664
        %708 = vmatmul.f32.gmra.mxu0 %v690
        %v709 = vpop.f32.mrf.mxu0
        %v710 = vadd.f32 0.0, %v709
        %711 = vdwg.mxu0
        %712 = vmatpush.msra.mxu0 0.0
        %713 = vmatpush.msra.mxu0 0.0
        %714 = vmatpush.msra.mxu0 0.0
        %715 = vmatpush.msra.mxu0 0.0
        %716 = vmatpush.msra.mxu0 0.0
        %717 = vmatpush.msra.mxu0 0.0
        %718 = vmatpush.msra.mxu0 0.0
        %719 = vmatpush.msra.mxu0 0.0
        %720 = vmatpush.msra.mxu0 0.0
        %721 = vmatpush.msra.mxu0 0.0
        %722 = vmatpush.msra.mxu0 0.0
        %723 = vmatpush.msra.mxu0 0.0
        %724 = vmatpush.msra.mxu0 %v674
        %725 = vmatpush.msra.mxu0 %v671
        %726 = vmatpush.msra.mxu0 %v668
        %727 = vmatpush.msra.mxu0 %v665
        %728 = vmatmul.f32.gmra.mxu0 %v690
        %v729 = vpop.f32.mrf.mxu0
        %v730 = vadd.f32 0.0, %v729
        %731 = vdwg.mxu0
        %732 = vmatpush.msra.mxu0 0.0
        %733 = vmatpush.msra.mxu0 0.0
        %734 = vmatpush.msra.mxu0 0.0
        %735 = vmatpush.msra.mxu0 0.0
        %736 = vmatpush.msra.mxu0 0.0
        %737 = vmatpush.msra.mxu0 0.0
        %738 = vmatpush.msra.mxu0 0.0
        %739 = vmatpush.msra.mxu0 0.0
        %740 = vmatpush.msra.mxu0 0.0
        %741 = vmatpush.msra.mxu0 0.0
        %742 = vmatpush.msra.mxu0 0.0
        %743 = vmatpush.msra.mxu0 0.0
        %744 = vmatpush.msra.mxu0 %v675
        %745 = vmatpush.msra.mxu0 %v672
        %746 = vmatpush.msra.mxu0 %v669
        %747 = vmatpush.msra.mxu0 %v666
        %748 = vmatmul.f32.gmra.mxu0 %v690
        %v749 = vpop.f32.mrf.mxu0
        %v750 = vadd.f32 0.0, %v749
        %751 = vdwg.mxu0
        %v752 = vadd.f32 %v584, %v710
        %v753 = vadd.f32 %v584, %v730
        %v754 = vadd.f32 %v584, %v750
        %755 = vrot.lane.b32.xlu0 %v586, 96
        %v756 = vpop.permute.xlu0 %755
        %757 = vrot.lane.b32.xlu0 %v587, 56
        %v758 = vpop.permute.xlu0 %757
        %759 = vrot.lane.b32.xlu0 %v588, 56
        %v760 = vpop.permute.xlu0 %759
        %761 = vrot.lane.b32.xlu0 %v589, 56
        %v762 = vpop.permute.xlu0 %761
        %763 = vrot.lane.b32.xlu0 %v590, 56
        %v764 = vpop.permute.xlu0 %763
        %765 = vrot.lane.b32.xlu0 %v604, 56
        %v766 = vpop.permute.xlu0 %765
        %767 = vrot.lane.b32.xlu0 %v605, 56
        %v768 = vpop.permute.xlu0 %767
        %769 = vrot.lane.b32.xlu0 %v606, 56
        %v770 = vpop.permute.xlu0 %769
        %771 = vrot.lane.b32.xlu0 %v602, 56
        %v772 = vpop.permute.xlu0 %771
        %773 = vrot.lane.b32.xlu0 %v616, 56
        %v774 = vpop.permute.xlu0 %773
        %775 = vrot.lane.b32.xlu0 %v617, 56
        %v776 = vpop.permute.xlu0 %775
        %777 = vrot.lane.b32.xlu0 %v618, 56
        %v778 = vpop.permute.xlu0 %777
        %779 = vrot.lane.b32.xlu0 %v614, 56
        %v780 = vpop.permute.xlu0 %779
        %781 = vrot.lane.b32.xlu0 %v628, 56
        %v782 = vpop.permute.xlu0 %781
        %783 = vrot.lane.b32.xlu0 %v629, 56
        %v784 = vpop.permute.xlu0 %783
        %785 = vrot.lane.b32.xlu0 %v630, 56
        %v786 = vpop.permute.xlu0 %785
        %787 = vrot.lane.b32.xlu0 %v626, 56
        %v788 = vpop.permute.xlu0 %787
        %vm789 = vcmask 457728
        %v790 = vsel %vm789, %v758, %v760
        %v791 = vsel %vm789, %v760, %v762
        %v792 = vsel %vm789, %v762, %v764
        %v793 = vsel %vm789, %v766, %v768
        %v794 = vsel %vm789, %v768, %v770
        %v795 = vsel %vm789, %v770, %v772
        %v796 = vsel %vm789, %v774, %v776
        %v797 = vsel %vm789, %v776, %v778
        %v798 = vsel %vm789, %v778, %v780
        %v799 = vsel %vm789, %v782, %v784
        %v800 = vsel %vm789, %v784, %v786
        %v801 = vsel %vm789, %v786, %v788
        %v814 = vsel %vm688, %v756, 0
        %816 = vmatpush.msra.mxu0 0.0
        %817 = vmatpush.msra.mxu0 0.0
        %818 = vmatpush.msra.mxu0 0.0
        %819 = vmatpush.msra.mxu0 0.0
        %820 = vmatpush.msra.mxu0 0.0
        %821 = vmatpush.msra.mxu0 0.0
        %822 = vmatpush.msra.mxu0 0.0
        %823 = vmatpush.msra.mxu0 0.0
        %824 = vmatpush.msra.mxu0 0.0
        %825 = vmatpush.msra.mxu0 0.0
        %826 = vmatpush.msra.mxu0 0.0
        %827 = vmatpush.msra.mxu0 0.0
        %828 = vmatpush.msra.mxu0 %v799
        %829 = vmatpush.msra.mxu0 %v796
        %830 = vmatpush.msra.mxu0 %v793
        %831 = vmatpush.msra.mxu0 %v790
        %832 = vmatmul.f32.gmra.mxu0 %v814
        %v833 = vpop.f32.mrf.mxu0
        %v834 = vadd.f32 0.0, %v833
        %835 = vdwg.mxu0
        %836 = vmatpush.msra.mxu0 0.0
        %837 = vmatpush.msra.mxu0 0.0
        %838 = vmatpush.msra.mxu0 0.0
        %839 = vmatpush.msra.mxu0 0.0
        %840 = vmatpush.msra.mxu0 0.0
        %841 = vmatpush.msra.mxu0 0.0
        %842 = vmatpush.msra.mxu0 0.0
        %843 = vmatpush.msra.mxu0 0.0
        %844 = vmatpush.msra.mxu0 0.0
        %845 = vmatpush.msra.mxu0 0.0
        %846 = vmatpush.msra.mxu0 0.0
        %847 = vmatpush.msra.mxu0 0.0
        %848 = vmatpush.msra.mxu0 %v800
        %849 = vmatpush.msra.mxu0 %v797
        %850 = vmatpush.msra.mxu0 %v794
        %851 = vmatpush.msra.mxu0 %v791
        %852 = vmatmul.f32.gmra.mxu0 %v814
        %v853 = vpop.f32.mrf.mxu0
        %v854 = vadd.f32 0.0, %v853
        %855 = vdwg.mxu0
        %856 = vmatpush.msra.mxu0 0.0
        %857 = vmatpush.msra.mxu0 0.0
        %858 = vmatpush.msra.mxu0 0.0
        %859 = vmatpush.msra.mxu0 0.0
        %860 = vmatpush.msra.mxu0 0.0
        %861 = vmatpush.msra.mxu0 0.0
        %862 = vmatpush.msra.mxu0 0.0
        %863 = vmatpush.msra.mxu0 0.0
        %864 = vmatpush.msra.mxu0 0.0
        %865 = vmatpush.msra.mxu0 0.0
        %866 = vmatpush.msra.mxu0 0.0
        %867 = vmatpush.msra.mxu0 0.0
        %868 = vmatpush.msra.mxu0 %v801
        %869 = vmatpush.msra.mxu0 %v798
        %870 = vmatpush.msra.mxu0 %v795
        %871 = vmatpush.msra.mxu0 %v792
        %872 = vmatmul.f32.gmra.mxu0 %v814
        %v873 = vpop.f32.mrf.mxu0
        %v874 = vadd.f32 0.0, %v873
        %875 = vdwg.mxu0
        %v876 = vadd.f32 %v752, %v834
        %v877 = vadd.f32 %v753, %v854
        %v878 = vadd.f32 %v754, %v874
        %879 = vrot.lane.b32.xlu0 %v586, 64
        %v880 = vpop.permute.xlu0 %879
        %881 = vrot.lane.b32.xlu0 %v587, 39
        %v882 = vpop.permute.xlu0 %881
        %883 = vrot.lane.b32.xlu0 %v588, 39
        %v884 = vpop.permute.xlu0 %883
        %885 = vrot.lane.b32.xlu0 %v589, 39
        %v886 = vpop.permute.xlu0 %885
        %887 = vrot.lane.b32.xlu0 %v590, 39
        %v888 = vpop.permute.xlu0 %887
        %889 = vrot.lane.b32.xlu0 %v604, 39
        %v890 = vpop.permute.xlu0 %889
        %891 = vrot.lane.b32.xlu0 %v605, 39
        %v892 = vpop.permute.xlu0 %891
        %893 = vrot.lane.b32.xlu0 %v606, 39
        %v894 = vpop.permute.xlu0 %893
        %895 = vrot.lane.b32.xlu0 %v602, 39
        %v896 = vpop.permute.xlu0 %895
        %897 = vrot.lane.b32.xlu0 %v616, 39
        %v898 = vpop.permute.xlu0 %897
        %899 = vrot.lane.b32.xlu0 %v617, 39
        %v900 = vpop.permute.xlu0 %899
        %901 = vrot.lane.b32.xlu0 %v618, 39
        %v902 = vpop.permute.xlu0 %901
        %903 = vrot.lane.b32.xlu0 %v614, 39
        %v904 = vpop.permute.xlu0 %903
        %905 = vrot.lane.b32.xlu0 %v628, 39
        %v906 = vpop.permute.xlu0 %905
        %907 = vrot.lane.b32.xlu0 %v629, 39
        %v908 = vpop.permute.xlu0 %907
        %909 = vrot.lane.b32.xlu0 %v630, 39
        %v910 = vpop.permute.xlu0 %909
        %911 = vrot.lane.b32.xlu0 %v626, 39
        %v912 = vpop.permute.xlu0 %911
        %vm913 = vcmask 318464
        %v914 = vsel %vm913, %v882, %v884
        %v915 = vsel %vm913, %v884, %v886
        %v916 = vsel %vm913, %v886, %v888
        %v917 = vsel %vm913, %v890, %v892
        %v918 = vsel %vm913, %v892, %v894
        %v919 = vsel %vm913, %v894, %v896
        %v920 = vsel %vm913, %v898, %v900
        %v921 = vsel %vm913, %v900, %v902
        %v922 = vsel %vm913, %v902, %v904
        %v923 = vsel %vm913, %v906, %v908
        %v924 = vsel %vm913, %v908, %v910
        %v925 = vsel %vm913, %v910, %v912
        %v938 = vsel %vm688, %v880, 0
        %940 = vmatpush.msra.mxu0 0.0
        %941 = vmatpush.msra.mxu0 0.0
        %942 = vmatpush.msra.mxu0 0.0
        %943 = vmatpush.msra.mxu0 0.0
        %944 = vmatpush.msra.mxu0 0.0
        %945 = vmatpush.msra.mxu0 0.0
        %946 = vmatpush.msra.mxu0 0.0
        %947 = vmatpush.msra.mxu0 0.0
        %948 = vmatpush.msra.mxu0 0.0
        %949 = vmatpush.msra.mxu0 0.0
        %950 = vmatpush.msra.mxu0 0.0
        %951 = vmatpush.msra.mxu0 0.0
        %952 = vmatpush.msra.mxu0 %v923
        %953 = vmatpush.msra.mxu0 %v920
        %954 = vmatpush.msra.mxu0 %v917
        %955 = vmatpush.msra.mxu0 %v914
        %956 = vmatmul.f32.gmra.mxu0 %v938
        %v957 = vpop.f32.mrf.mxu0
        %v958 = vadd.f32 0.0, %v957
        %959 = vdwg.mxu0
        %960 = vmatpush.msra.mxu0 0.0
        %961 = vmatpush.msra.mxu0 0.0
        %962 = vmatpush.msra.mxu0 0.0
        %963 = vmatpush.msra.mxu0 0.0
        %964 = vmatpush.msra.mxu0 0.0
        %965 = vmatpush.msra.mxu0 0.0
        %966 = vmatpush.msra.mxu0 0.0
        %967 = vmatpush.msra.mxu0 0.0
        %968 = vmatpush.msra.mxu0 0.0
        %969 = vmatpush.msra.mxu0 0.0
        %970 = vmatpush.msra.mxu0 0.0
        %971 = vmatpush.msra.mxu0 0.0
        %972 = vmatpush.msra.mxu0 %v924
        %973 = vmatpush.msra.mxu0 %v921
        %974 = vmatpush.msra.mxu0 %v918
        %975 = vmatpush.msra.mxu0 %v915
        %976 = vmatmul.f32.gmra.mxu0 %v938
        %v977 = vpop.f32.mrf.mxu0
        %v978 = vadd.f32 0.0, %v977
        %979 = vdwg.mxu0
        %980 = vmatpush.msra.mxu0 0.0
        %981 = vmatpush.msra.mxu0 0.0
        %982 = vmatpush.msra.mxu0 0.0
        %983 = vmatpush.msra.mxu0 0.0
        %984 = vmatpush.msra.mxu0 0.0
        %985 = vmatpush.msra.mxu0 0.0
        %986 = vmatpush.msra.mxu0 0.0
        %987 = vmatpush.msra.mxu0 0.0
        %988 = vmatpush.msra.mxu0 0.0
        %989 = vmatpush.msra.mxu0 0.0
        %990 = vmatpush.msra.mxu0 0.0
        %991 = vmatpush.msra.mxu0 0.0
        %992 = vmatpush.msra.mxu0 %v925
        %993 = vmatpush.msra.mxu0 %v922
        %994 = vmatpush.msra.mxu0 %v919
        %995 = vmatpush.msra.mxu0 %v916
        %996 = vmatmul.f32.gmra.mxu0 %v938
        %v997 = vpop.f32.mrf.mxu0
        %v998 = vadd.f32 0.0, %v997
        %999 = vdwg.mxu0
        %v1000 = vadd.f32 %v876, %v958
        %v1001 = vadd.f32 %v877, %v978
        %v1002 = vadd.f32 %v878, %v998
        %1003 = vrot.lane.b32.xlu0 %v586, 32
        %v1004 = vpop.permute.xlu0 %1003
        %1005 = vrot.lane.b32.xlu0 %v587, 38
        %v1006 = vpop.permute.xlu0 %1005
        %1007 = vrot.lane.b32.xlu0 %v588, 38
        %v1008 = vpop.permute.xlu0 %1007
        %1009 = vrot.lane.b32.xlu0 %v589, 38
        %v1010 = vpop.permute.xlu0 %1009
        %1011 = vrot.lane.b32.xlu0 %v590, 38
        %v1012 = vpop.permute.xlu0 %1011
        %1013 = vrot.lane.b32.xlu0 %v604, 38
        %v1014 = vpop.permute.xlu0 %1013
        %1015 = vrot.lane.b32.xlu0 %v605, 38
        %v1016 = vpop.permute.xlu0 %1015
        %1017 = vrot.lane.b32.xlu0 %v606, 38
        %v1018 = vpop.permute.xlu0 %1017
        %1019 = vrot.lane.b32.xlu0 %v602, 38
        %v1020 = vpop.permute.xlu0 %1019
        %1021 = vrot.lane.b32.xlu0 %v616, 38
        %v1022 = vpop.permute.xlu0 %1021
        %1023 = vrot.lane.b32.xlu0 %v617, 38
        %v1024 = vpop.permute.xlu0 %1023
        %1025 = vrot.lane.b32.xlu0 %v618, 38
        %v1026 = vpop.permute.xlu0 %1025
        %1027 = vrot.lane.b32.xlu0 %v614, 38
        %v1028 = vpop.permute.xlu0 %1027
        %1029 = vrot.lane.b32.xlu0 %v622, 38
        %v1030 = vpop.permute.xlu0 %1029
        %1031 = vrot.lane.b32.xlu0 %v629, 38
        %v1032 = vpop.permute.xlu0 %1031
        %1033 = vrot.lane.b32.xlu0 %v630, 38
        %v1034 = vpop.permute.xlu0 %1033
        %1035 = vrot.lane.b32.xlu0 %v626, 38
        %v1036 = vpop.permute.xlu0 %1035
        %vm1037 = vcmask 310272
        %v1038 = vsel %vm1037, %v1006, %v1008
        %v1039 = vsel %vm1037, %v1008, %v1010
        %v1040 = vsel %vm1037, %v1010, %v1012
        %v1041 = vsel %vm1037, %v1014, %v1016
        %v1042 = vsel %vm1037, %v1016, %v1018
        %v1043 = vsel %vm1037, %v1018, %v1020
        %v1044 = vsel %vm1037, %v1022, %v1024
        %v1045 = vsel %vm1037, %v1024, %v1026
        %v1046 = vsel %vm1037, %v1026, %v1028
        %v1047 = vsel %vm1037, %v1030, %v1032
        %v1048 = vsel %vm1037, %v1032, %v1034
        %v1049 = vsel %vm1037, %v1034, %v1036
        %v1062 = vsel %vm688, %v1004, 0
        %1064 = vmatpush.msra.mxu0 0.0
        %1065 = vmatpush.msra.mxu0 0.0
        %1066 = vmatpush.msra.mxu0 0.0
        %1067 = vmatpush.msra.mxu0 0.0
        %1068 = vmatpush.msra.mxu0 0.0
        %1069 = vmatpush.msra.mxu0 0.0
        %1070 = vmatpush.msra.mxu0 0.0
        %1071 = vmatpush.msra.mxu0 0.0
        %1072 = vmatpush.msra.mxu0 0.0
        %1073 = vmatpush.msra.mxu0 0.0
        %1074 = vmatpush.msra.mxu0 0.0
        %1075 = vmatpush.msra.mxu0 0.0
        %1076 = vmatpush.msra.mxu0 %v1047
        %1077 = vmatpush.msra.mxu0 %v1044
        %1078 = vmatpush.msra.mxu0 %v1041
        %1079 = vmatpush.msra.mxu0 %v1038
        %1080 = vmatmul.f32.gmra.mxu0 %v1062
        %v1081 = vpop.f32.mrf.mxu0
        %v1082 = vadd.f32 0.0, %v1081
        %1083 = vdwg.mxu0
        %1084 = vmatpush.msra.mxu0 0.0
        %1085 = vmatpush.msra.mxu0 0.0
        %1086 = vmatpush.msra.mxu0 0.0
        %1087 = vmatpush.msra.mxu0 0.0
        %1088 = vmatpush.msra.mxu0 0.0
        %1089 = vmatpush.msra.mxu0 0.0
        %1090 = vmatpush.msra.mxu0 0.0
        %1091 = vmatpush.msra.mxu0 0.0
        %1092 = vmatpush.msra.mxu0 0.0
        %1093 = vmatpush.msra.mxu0 0.0
        %1094 = vmatpush.msra.mxu0 0.0
        %1095 = vmatpush.msra.mxu0 0.0
        %1096 = vmatpush.msra.mxu0 %v1048
        %1097 = vmatpush.msra.mxu0 %v1045
        %1098 = vmatpush.msra.mxu0 %v1042
        %1099 = vmatpush.msra.mxu0 %v1039
        %1100 = vmatmul.f32.gmra.mxu0 %v1062
        %v1101 = vpop.f32.mrf.mxu0
        %v1102 = vadd.f32 0.0, %v1101
        %1103 = vdwg.mxu0
        %1104 = vmatpush.msra.mxu0 0.0
        %1105 = vmatpush.msra.mxu0 0.0
        %1106 = vmatpush.msra.mxu0 0.0
        %1107 = vmatpush.msra.mxu0 0.0
        %1108 = vmatpush.msra.mxu0 0.0
        %1109 = vmatpush.msra.mxu0 0.0
        %1110 = vmatpush.msra.mxu0 0.0
        %1111 = vmatpush.msra.mxu0 0.0
        %1112 = vmatpush.msra.mxu0 0.0
        %1113 = vmatpush.msra.mxu0 0.0
        %1114 = vmatpush.msra.mxu0 0.0
        %1115 = vmatpush.msra.mxu0 0.0
        %1116 = vmatpush.msra.mxu0 %v1049
        %1117 = vmatpush.msra.mxu0 %v1046
        %1118 = vmatpush.msra.mxu0 %v1043
        %1119 = vmatpush.msra.mxu0 %v1040
        %1120 = vmatmul.f32.gmra.mxu0 %v1062
        %v1121 = vpop.f32.mrf.mxu0
        %v1122 = vadd.f32 0.0, %v1121
        %1123 = vdwg.mxu0
        %v1124 = vadd.f32 %v1000, %v1082
        %v1125 = vadd.f32 %v1001, %v1102
        %v1126 = vadd.f32 %v1002, %v1122
        %v1128 = vperm.slane %v482, 0
        %v1129 = vperm.slane %v482, 1
        %v1130 = vperm.slane %v482, 2
        %v1134 = vmul.f32 %v1124, %v1128
        %v1135 = vmul.f32 %v1125, %v1129
        %v1136 = vmul.f32 %v1126, %v1130
        %1137 = vst [vmem:[#allocation3 + $0x8] sm:$0xff] %v1134
        %1138 = vst [vmem:[#allocation3 + $0x10] sm:$0xff] %v1135
        %1139 = vst [vmem:[#allocation3 + $0x18] sm:$0xff] %v1136
        %v1140 = vld [vmem:[%s7] sm:$0xff]
        %1142 = vset.pattern.permute.xlu0 0
        %1143 = vperm.xlu0 %1142, %v1140
        %v1144 = vpop.permute.xlu0 %1143
        %v1146 = vld [vmem:[#allocation11] sm:$0xff]
        %v1147 = vld [vmem:[#allocation3] sm:$0xff]
        %v1148 = vld [vmem:[#allocation3 + $0x8] sm:$0xff]
        %v1149 = vld [vmem:[#allocation3 + $0x10] sm:$0xff]
        %v1150 = vld [vmem:[#allocation3 + $0x18] sm:$0xff]
        %v1151 = vld [vmem:[#allocation3 + $0x8] sm:$0xff]
        %v1152 = vld [vmem:[#allocation3 + $0x10] sm:$0xff]
        %v1153 = vld [vmem:[#allocation3 + $0x18] sm:$0xff]
        %v1154 = vld [vmem:[#allocation3 + $0x20] sm:$0xff]
        %1159 = vrot.lane.b32.xlu0 %v1147, 127
        %v1160 = vpop.permute.xlu0 %1159
        %1161 = vrot.lane.b32.xlu0 %v1148, 127
        %v1162 = vpop.permute.xlu0 %1161
        %1163 = vrot.lane.b32.xlu0 %v1149, 127
        %v1164 = vpop.permute.xlu0 %1163
        %1165 = vrot.lane.b32.xlu0 %v1150, 127
        %v1166 = vpop.permute.xlu0 %1165
        %vm1167 = vcmask 1039360
        %v1168 = vsel %vm1167, %v1160, %v1162
        %v1169 = vsel %vm1167, %v1162, %v1164
        %v1170 = vsel %vm1167, %v1164, %v1166
        %1171 = vrot.lane.b32.xlu0 %v1147, 126
        %v1172 = vpop.permute.xlu0 %1171
        %1173 = vrot.lane.b32.xlu0 %v1148, 126
        %v1174 = vpop.permute.xlu0 %1173
        %1175 = vrot.lane.b32.xlu0 %v1149, 126
        %v1176 = vpop.permute.xlu0 %1175
        %1177 = vrot.lane.b32.xlu0 %v1150, 126
        %v1178 = vpop.permute.xlu0 %1177
        %v1179 = vsel %vm603, %v1172, %v1174
        %v1180 = vsel %vm603, %v1174, %v1176
        %v1181 = vsel %vm603, %v1176, %v1178
        %1182 = vrot.lane.b32.xlu0 %v1147, 110
        %v1183 = vpop.permute.xlu0 %1182
        %1184 = vrot.lane.b32.xlu0 %v1148, 110
        %v1185 = vpop.permute.xlu0 %1184
        %1186 = vrot.lane.b32.xlu0 %v1149, 110
        %v1187 = vpop.permute.xlu0 %1186
        %1188 = vrot.lane.b32.xlu0 %v1150, 110
        %v1189 = vpop.permute.xlu0 %1188
        %vm1190 = vcmask 900096
        %v1191 = vsel %vm1190, %v1183, %v1185
        %v1192 = vsel %vm1190, %v1185, %v1187
        %v1193 = vsel %vm1190, %v1187, %v1189
        %1194 = vrot.lane.b32.xlu0 %v1148, 109
        %v1195 = vpop.permute.xlu0 %1194
        %1196 = vrot.lane.b32.xlu0 %v1149, 109
        %v1197 = vpop.permute.xlu0 %1196
        %1198 = vrot.lane.b32.xlu0 %v1150, 109
        %v1199 = vpop.permute.xlu0 %1198
        %vm1200 = vcmask 891904
        %v1201 = vsel %vm1200, %v1195, %v1197
        %v1202 = vsel %vm1200, %v1197, %v1199
        %1207 = vrot.lane.b32.xlu0 %v1151, 108
        %v1208 = vpop.permute.xlu0 %1207
        %1209 = vrot.lane.b32.xlu0 %v1152, 108
        %v1210 = vpop.permute.xlu0 %1209
        %1211 = vrot.lane.b32.xlu0 %v1153, 108
        %v1212 = vpop.permute.xlu0 %1211
        %1213 = vrot.lane.b32.xlu0 %v1154, 108
        %v1214 = vpop.permute.xlu0 %1213
        %vm1215 = vcmask 883712
        %v1216 = vsel %vm1215, %v1208, %v1210
        %v1217 = vsel %vm1215, %v1210, %v1212
        %v1218 = vsel %vm1215, %v1212, %v1214
        %1219 = vrot.lane.b32.xlu0 %v1151, 92
        %v1220 = vpop.permute.xlu0 %1219
        %1221 = vrot.lane.b32.xlu0 %v1152, 92
        %v1222 = vpop.permute.xlu0 %1221
        %1223 = vrot.lane.b32.xlu0 %v1153, 92
        %v1224 = vpop.permute.xlu0 %1223
        %1225 = vrot.lane.b32.xlu0 %v1154, 92
        %v1226 = vpop.permute.xlu0 %1225
        %v1227 = vsel %vm615, %v1220, %v1222
        %v1228 = vsel %vm615, %v1222, %v1224
        %v1229 = vsel %vm615, %v1224, %v1226
        %1230 = vrot.lane.b32.xlu0 %v1151, 91
        %v1231 = vpop.permute.xlu0 %1230
        %1232 = vrot.lane.b32.xlu0 %v1152, 91
        %v1233 = vpop.permute.xlu0 %1232
        %1234 = vrot.lane.b32.xlu0 %v1153, 91
        %v1235 = vpop.permute.xlu0 %1234
        %1236 = vrot.lane.b32.xlu0 %v1154, 91
        %v1237 = vpop.permute.xlu0 %1236
        %vm1238 = vcmask 744448
        %v1239 = vsel %vm1238, %v1231, %v1233
        %v1240 = vsel %vm1238, %v1233, %v1235
        %v1241 = vsel %vm1238, %v1235, %v1237
        %1242 = vrot.lane.b32.xlu0 %v1151, 90
        %v1243 = vpop.permute.xlu0 %1242
        %1244 = vrot.lane.b32.xlu0 %v1152, 90
        %v1245 = vpop.permute.xlu0 %1244
        %1246 = vrot.lane.b32.xlu0 %v1153, 90
        %v1247 = vpop.permute.xlu0 %1246
        %1248 = vrot.lane.b32.xlu0 %v1154, 90
        %v1249 = vpop.permute.xlu0 %1248
        %v1250 = vsel %vm627, %v1243, %v1245
        %v1251 = vsel %vm627, %v1245, %v1247
        %v1252 = vsel %vm627, %v1247, %v1249
        %1253 = vrot.lane.b32.xlu0 %v1147, 19
        %v1254 = vpop.permute.xlu0 %1253
        %1255 = vrot.lane.b32.xlu0 %v1148, 19
        %v1256 = vpop.permute.xlu0 %1255
        %1257 = vrot.lane.b32.xlu0 %v1149, 19
        %v1258 = vpop.permute.xlu0 %1257
        %1259 = vrot.lane.b32.xlu0 %v1150, 19
        %v1260 = vpop.permute.xlu0 %1259
        %1261 = vrot.lane.b32.xlu0 %v1168, 19
        %v1262 = vpop.permute.xlu0 %1261
        %1263 = vrot.lane.b32.xlu0 %v1169, 19
        %v1264 = vpop.permute.xlu0 %1263
        %1265 = vrot.lane.b32.xlu0 %v1170, 19
        %v1266 = vpop.permute.xlu0 %1265
        %1267 = vrot.lane.b32.xlu0 %v1166, 19
        %v1268 = vpop.permute.xlu0 %1267
        %1269 = vrot.lane.b32.xlu0 %v1179, 19
        %v1270 = vpop.permute.xlu0 %1269
        %1271 = vrot.lane.b32.xlu0 %v1180, 19
        %v1272 = vpop.permute.xlu0 %1271
        %1273 = vrot.lane.b32.xlu0 %v1181, 19
        %v1274 = vpop.permute.xlu0 %1273
        %1275 = vrot.lane.b32.xlu0 %v1178, 19
        %v1276 = vpop.permute.xlu0 %1275
        %1277 = vrot.lane.b32.xlu0 %v1191, 19
        %v1278 = vpop.permute.xlu0 %1277
        %1279 = vrot.lane.b32.xlu0 %v1192, 19
        %v1280 = vpop.permute.xlu0 %1279
        %1281 = vrot.lane.b32.xlu0 %v1193, 19
        %v1282 = vpop.permute.xlu0 %1281
        %1283 = vrot.lane.b32.xlu0 %v1189, 19
        %v1284 = vpop.permute.xlu0 %1283
        %1285 = vrot.lane.b32.xlu0 %v1195, 19
        %v1286 = vpop.permute.xlu0 %1285
        %1287 = vrot.lane.b32.xlu0 %v1201, 19
        %v1288 = vpop.permute.xlu0 %1287
        %1289 = vrot.lane.b32.xlu0 %v1202, 19
        %v1290 = vpop.permute.xlu0 %1289
        %1291 = vrot.lane.b32.xlu0 %v1199, 19
        %v1292 = vpop.permute.xlu0 %1291
        %1293 = vrot.lane.b32.xlu0 %v1208, 19
        %v1294 = vpop.permute.xlu0 %1293
        %1295 = vrot.lane.b32.xlu0 %v1216, 19
        %v1296 = vpop.permute.xlu0 %1295
        %1297 = vrot.lane.b32.xlu0 %v1217, 19
        %v1298 = vpop.permute.xlu0 %1297
        %1299 = vrot.lane.b32.xlu0 %v1218, 19
        %v1300 = vpop.permute.xlu0 %1299
        %1301 = vrot.lane.b32.xlu0 %v1220, 19
        %v1302 = vpop.permute.xlu0 %1301
        %1303 = vrot.lane.b32.xlu0 %v1227, 19
        %v1304 = vpop.permute.xlu0 %1303
        %1305 = vrot.lane.b32.xlu0 %v1228, 19
        %v1306 = vpop.permute.xlu0 %1305
        %1307 = vrot.lane.b32.xlu0 %v1229, 19
        %v1308 = vpop.permute.xlu0 %1307
        %1309 = vrot.lane.b32.xlu0 %v1231, 19
        %v1310 = vpop.permute.xlu0 %1309
        %1311 = vrot.lane.b32.xlu0 %v1239, 19
        %v1312 = vpop.permute.xlu0 %1311
        %1313 = vrot.lane.b32.xlu0 %v1240, 19
        %v1314 = vpop.permute.xlu0 %1313
        %1315 = vrot.lane.b32.xlu0 %v1241, 19
        %v1316 = vpop.permute.xlu0 %1315
        %1317 = vrot.lane.b32.xlu0 %v1243, 19
        %v1318 = vpop.permute.xlu0 %1317
        %1319 = vrot.lane.b32.xlu0 %v1250, 19
        %v1320 = vpop.permute.xlu0 %1319
        %1321 = vrot.lane.b32.xlu0 %v1251, 19
        %v1322 = vpop.permute.xlu0 %1321
        %1323 = vrot.lane.b32.xlu0 %v1252, 19
        %v1324 = vpop.permute.xlu0 %1323
        %vm1325 = vcmask 154624
        %v1326 = vsel %vm1325, %v1254, %v1256
        %v1327 = vsel %vm1325, %v1256, %v1258
        %v1328 = vsel %vm1325, %v1258, %v1260
        %v1329 = vsel %vm1325, %v1262, %v1264
        %v1330 = vsel %vm1325, %v1264, %v1266
        %v1331 = vsel %vm1325, %v1266, %v1268
        %v1332 = vsel %vm1325, %v1270, %v1272
        %v1333 = vsel %vm1325, %v1272, %v1274
        %v1334 = vsel %vm1325, %v1274, %v1276
        %v1335 = vsel %vm1325, %v1278, %v1280
        %v1336 = vsel %vm1325, %v1280, %v1282
        %v1337 = vsel %vm1325, %v1282, %v1284
        %v1338 = vsel %vm1325, %v1286, %v1288
        %v1339 = vsel %vm1325, %v1288, %v1290
        %v1340 = vsel %vm1325, %v1290, %v1292
        %v1341 = vsel %vm1325, %v1294, %v1296
        %v1342 = vsel %vm1325, %v1296, %v1298
        %v1343 = vsel %vm1325, %v1298, %v1300
        %v1344 = vsel %vm1325, %v1302, %v1304
        %v1345 = vsel %vm1325, %v1304, %v1306
        %v1346 = vsel %vm1325, %v1306, %v1308
        %v1347 = vsel %vm1325, %v1310, %v1312
        %v1348 = vsel %vm1325, %v1312, %v1314
        %v1349 = vsel %vm1325, %v1314, %v1316
        %v1350 = vsel %vm1325, %v1318, %v1320
        %v1351 = vsel %vm1325, %v1320, %v1322
        %v1352 = vsel %vm1325, %v1322, %v1324
        %vm1380 = vcmask 588800
        %v1382 = vsel %vm1380, %v1146, 0
        %1384 = vmatpush.msra.mxu0 0.0
        %1385 = vmatpush.msra.mxu0 0.0
        %1386 = vmatpush.msra.mxu0 0.0
        %1387 = vmatpush.msra.mxu0 0.0
        %1388 = vmatpush.msra.mxu0 0.0
        %1389 = vmatpush.msra.mxu0 0.0
        %1390 = vmatpush.msra.mxu0 0.0
        %1391 = vmatpush.msra.mxu0 %v1350
        %1392 = vmatpush.msra.mxu0 %v1347
        %1393 = vmatpush.msra.mxu0 %v1344
        %1394 = vmatpush.msra.mxu0 %v1341
        %1395 = vmatpush.msra.mxu0 %v1338
        %1396 = vmatpush.msra.mxu0 %v1335
        %1397 = vmatpush.msra.mxu0 %v1332
        %1398 = vmatpush.msra.mxu0 %v1329
        %1399 = vmatpush.msra.mxu0 %v1326
        %1400 = vmatmul.f32.gmra.mxu0 %v1382
        %v1401 = vpop.f32.mrf.mxu0
        %v1402 = vadd.f32 0.0, %v1401
        %1403 = vdwg.mxu0
        %1404 = vmatpush.msra.mxu0 0.0
        %1405 = vmatpush.msra.mxu0 0.0
        %1406 = vmatpush.msra.mxu0 0.0
        %1407 = vmatpush.msra.mxu0 0.0
        %1408 = vmatpush.msra.mxu0 0.0
        %1409 = vmatpush.msra.mxu0 0.0
        %1410 = vmatpush.msra.mxu0 0.0
        %1411 = vmatpush.msra.mxu0 %v1351
        %1412 = vmatpush.msra.mxu0 %v1348
        %1413 = vmatpush.msra.mxu0 %v1345
        %1414 = vmatpush.msra.mxu0 %v1342
        %1415 = vmatpush.msra.mxu0 %v1339
        %1416 = vmatpush.msra.mxu0 %v1336
        %1417 = vmatpush.msra.mxu0 %v1333
        %1418 = vmatpush.msra.mxu0 %v1330
        %1419 = vmatpush.msra.mxu0 %v1327
        %1420 = vmatmul.f32.gmra.mxu0 %v1382
        %v1421 = vpop.f32.mrf.mxu0
        %v1422 = vadd.f32 0.0, %v1421
        %1423 = vdwg.mxu0
        %1424 = vmatpush.msra.mxu0 0.0
        %1425 = vmatpush.msra.mxu0 0.0
        %1426 = vmatpush.msra.mxu0 0.0
        %1427 = vmatpush.msra.mxu0 0.0
        %1428 = vmatpush.msra.mxu0 0.0
        %1429 = vmatpush.msra.mxu0 0.0
        %1430 = vmatpush.msra.mxu0 0.0
        %1431 = vmatpush.msra.mxu0 %v1352
        %1432 = vmatpush.msra.mxu0 %v1349
        %1433 = vmatpush.msra.mxu0 %v1346
        %1434 = vmatpush.msra.mxu0 %v1343
        %1435 = vmatpush.msra.mxu0 %v1340
        %1436 = vmatpush.msra.mxu0 %v1337
        %1437 = vmatpush.msra.mxu0 %v1334
        %1438 = vmatpush.msra.mxu0 %v1331
        %1439 = vmatpush.msra.mxu0 %v1328
        %1440 = vmatmul.f32.gmra.mxu0 %v1382
        %v1441 = vpop.f32.mrf.mxu0
        %v1442 = vadd.f32 0.0, %v1441
        %1443 = vdwg.mxu0
        %v1444 = vadd.f32 %v1144, %v1402
        %v1445 = vadd.f32 %v1144, %v1422
        %v1446 = vadd.f32 %v1144, %v1442
        %v1447 = vld [vmem:[#allocation13] sm:$0xff]
        %v1448 = vld [vmem:[%s414] sm:$0xff]
        %v1449 = vld [vmem:[%s414 + $0x8] sm:$0xff]
        %v1450 = vld [vmem:[%s414 + $0x10] sm:$0xff]
        %v1451 = vld [vmem:[%s414 + $0x18] sm:$0xff]
        %v1452 = vld [vmem:[%s414 + $0x8] sm:$0xff]
        %v1453 = vld [vmem:[%s414 + $0x10] sm:$0xff]
        %v1454 = vld [vmem:[%s414 + $0x18] sm:$0xff]
        %v1455 = vld [vmem:[%s414 + $0x20] sm:$0xff]
        %1460 = vrot.lane.b32.xlu0 %v1448, 127
        %v1461 = vpop.permute.xlu0 %1460
        %1462 = vrot.lane.b32.xlu0 %v1449, 127
        %v1463 = vpop.permute.xlu0 %1462
        %1464 = vrot.lane.b32.xlu0 %v1450, 127
        %v1465 = vpop.permute.xlu0 %1464
        %1466 = vrot.lane.b32.xlu0 %v1451, 127
        %v1467 = vpop.permute.xlu0 %1466
        %v1468 = vsel %vm1167, %v1461, %v1463
        %v1469 = vsel %vm1167, %v1463, %v1465
        %v1470 = vsel %vm1167, %v1465, %v1467
        %1471 = vrot.lane.b32.xlu0 %v1448, 126
        %v1472 = vpop.permute.xlu0 %1471
        %1473 = vrot.lane.b32.xlu0 %v1449, 126
        %v1474 = vpop.permute.xlu0 %1473
        %1475 = vrot.lane.b32.xlu0 %v1450, 126
        %v1476 = vpop.permute.xlu0 %1475
        %1477 = vrot.lane.b32.xlu0 %v1451, 126
        %v1478 = vpop.permute.xlu0 %1477
        %v1479 = vsel %vm603, %v1472, %v1474
        %v1480 = vsel %vm603, %v1474, %v1476
        %v1481 = vsel %vm603, %v1476, %v1478
        %1482 = vrot.lane.b32.xlu0 %v1448, 110
        %v1483 = vpop.permute.xlu0 %1482
        %1484 = vrot.lane.b32.xlu0 %v1449, 110
        %v1485 = vpop.permute.xlu0 %1484
        %1486 = vrot.lane.b32.xlu0 %v1450, 110
        %v1487 = vpop.permute.xlu0 %1486
        %1488 = vrot.lane.b32.xlu0 %v1451, 110
        %v1489 = vpop.permute.xlu0 %1488
        %v1490 = vsel %vm1190, %v1483, %v1485
        %v1491 = vsel %vm1190, %v1485, %v1487
        %v1492 = vsel %vm1190, %v1487, %v1489
        %1493 = vrot.lane.b32.xlu0 %v1449, 109
        %v1494 = vpop.permute.xlu0 %1493
        %1495 = vrot.lane.b32.xlu0 %v1450, 109
        %v1496 = vpop.permute.xlu0 %1495
        %1497 = vrot.lane.b32.xlu0 %v1451, 109
        %v1498 = vpop.permute.xlu0 %1497
        %v1499 = vsel %vm1200, %v1494, %v1496
        %v1500 = vsel %vm1200, %v1496, %v1498
        %1505 = vrot.lane.b32.xlu0 %v1452, 108
        %v1506 = vpop.permute.xlu0 %1505
        %1507 = vrot.lane.b32.xlu0 %v1453, 108
        %v1508 = vpop.permute.xlu0 %1507
        %1509 = vrot.lane.b32.xlu0 %v1454, 108
        %v1510 = vpop.permute.xlu0 %1509
        %1511 = vrot.lane.b32.xlu0 %v1455, 108
        %v1512 = vpop.permute.xlu0 %1511
        %v1513 = vsel %vm1215, %v1506, %v1508
        %v1514 = vsel %vm1215, %v1508, %v1510
        %v1515 = vsel %vm1215, %v1510, %v1512
        %1516 = vrot.lane.b32.xlu0 %v1452, 92
        %v1517 = vpop.permute.xlu0 %1516
        %1518 = vrot.lane.b32.xlu0 %v1453, 92
        %v1519 = vpop.permute.xlu0 %1518
        %1520 = vrot.lane.b32.xlu0 %v1454, 92
        %v1521 = vpop.permute.xlu0 %1520
        %1522 = vrot.lane.b32.xlu0 %v1455, 92
        %v1523 = vpop.permute.xlu0 %1522
        %v1524 = vsel %vm615, %v1517, %v1519
        %v1525 = vsel %vm615, %v1519, %v1521
        %v1526 = vsel %vm615, %v1521, %v1523
        %1527 = vrot.lane.b32.xlu0 %v1452, 91
        %v1528 = vpop.permute.xlu0 %1527
        %1529 = vrot.lane.b32.xlu0 %v1453, 91
        %v1530 = vpop.permute.xlu0 %1529
        %1531 = vrot.lane.b32.xlu0 %v1454, 91
        %v1532 = vpop.permute.xlu0 %1531
        %1533 = vrot.lane.b32.xlu0 %v1455, 91
        %v1534 = vpop.permute.xlu0 %1533
        %v1535 = vsel %vm1238, %v1528, %v1530
        %v1536 = vsel %vm1238, %v1530, %v1532
        %v1537 = vsel %vm1238, %v1532, %v1534
        %1538 = vrot.lane.b32.xlu0 %v1452, 90
        %v1539 = vpop.permute.xlu0 %1538
        %1540 = vrot.lane.b32.xlu0 %v1453, 90
        %v1541 = vpop.permute.xlu0 %1540
        %1542 = vrot.lane.b32.xlu0 %v1454, 90
        %v1543 = vpop.permute.xlu0 %1542
        %1544 = vrot.lane.b32.xlu0 %v1455, 90
        %v1545 = vpop.permute.xlu0 %1544
        %v1546 = vsel %vm627, %v1539, %v1541
        %v1547 = vsel %vm627, %v1541, %v1543
        %v1548 = vsel %vm627, %v1543, %v1545
        %1549 = vrot.lane.b32.xlu0 %v1448, 19
        %v1550 = vpop.permute.xlu0 %1549
        %1551 = vrot.lane.b32.xlu0 %v1449, 19
        %v1552 = vpop.permute.xlu0 %1551
        %1553 = vrot.lane.b32.xlu0 %v1450, 19
        %v1554 = vpop.permute.xlu0 %1553
        %1555 = vrot.lane.b32.xlu0 %v1451, 19
        %v1556 = vpop.permute.xlu0 %1555
        %1557 = vrot.lane.b32.xlu0 %v1468, 19
        %v1558 = vpop.permute.xlu0 %1557
        %1559 = vrot.lane.b32.xlu0 %v1469, 19
        %v1560 = vpop.permute.xlu0 %1559
        %1561 = vrot.lane.b32.xlu0 %v1470, 19
        %v1562 = vpop.permute.xlu0 %1561
        %1563 = vrot.lane.b32.xlu0 %v1467, 19
        %v1564 = vpop.permute.xlu0 %1563
        %1565 = vrot.lane.b32.xlu0 %v1479, 19
        %v1566 = vpop.permute.xlu0 %1565
        %1567 = vrot.lane.b32.xlu0 %v1480, 19
        %v1568 = vpop.permute.xlu0 %1567
        %1569 = vrot.lane.b32.xlu0 %v1481, 19
        %v1570 = vpop.permute.xlu0 %1569
        %1571 = vrot.lane.b32.xlu0 %v1478, 19
        %v1572 = vpop.permute.xlu0 %1571
        %1573 = vrot.lane.b32.xlu0 %v1490, 19
        %v1574 = vpop.permute.xlu0 %1573
        %1575 = vrot.lane.b32.xlu0 %v1491, 19
        %v1576 = vpop.permute.xlu0 %1575
        %1577 = vrot.lane.b32.xlu0 %v1492, 19
        %v1578 = vpop.permute.xlu0 %1577
        %1579 = vrot.lane.b32.xlu0 %v1489, 19
        %v1580 = vpop.permute.xlu0 %1579
        %1581 = vrot.lane.b32.xlu0 %v1494, 19
        %v1582 = vpop.permute.xlu0 %1581
        %1583 = vrot.lane.b32.xlu0 %v1499, 19
        %v1584 = vpop.permute.xlu0 %1583
        %1585 = vrot.lane.b32.xlu0 %v1500, 19
        %v1586 = vpop.permute.xlu0 %1585
        %1587 = vrot.lane.b32.xlu0 %v1498, 19
        %v1588 = vpop.permute.xlu0 %1587
        %1589 = vrot.lane.b32.xlu0 %v1506, 19
        %v1590 = vpop.permute.xlu0 %1589
        %1591 = vrot.lane.b32.xlu0 %v1513, 19
        %v1592 = vpop.permute.xlu0 %1591
        %1593 = vrot.lane.b32.xlu0 %v1514, 19
        %v1594 = vpop.permute.xlu0 %1593
        %1595 = vrot.lane.b32.xlu0 %v1515, 19
        %v1596 = vpop.permute.xlu0 %1595
        %1597 = vrot.lane.b32.xlu0 %v1517, 19
        %v1598 = vpop.permute.xlu0 %1597
        %1599 = vrot.lane.b32.xlu0 %v1524, 19
        %v1600 = vpop.permute.xlu0 %1599
        %1601 = vrot.lane.b32.xlu0 %v1525, 19
        %v1602 = vpop.permute.xlu0 %1601
        %1603 = vrot.lane.b32.xlu0 %v1526, 19
        %v1604 = vpop.permute.xlu0 %1603
        %1605 = vrot.lane.b32.xlu0 %v1528, 19
        %v1606 = vpop.permute.xlu0 %1605
        %1607 = vrot.lane.b32.xlu0 %v1535, 19
        %v1608 = vpop.permute.xlu0 %1607
        %1609 = vrot.lane.b32.xlu0 %v1536, 19
        %v1610 = vpop.permute.xlu0 %1609
        %1611 = vrot.lane.b32.xlu0 %v1537, 19
        %v1612 = vpop.permute.xlu0 %1611
        %1613 = vrot.lane.b32.xlu0 %v1539, 19
        %v1614 = vpop.permute.xlu0 %1613
        %1615 = vrot.lane.b32.xlu0 %v1546, 19
        %v1616 = vpop.permute.xlu0 %1615
        %1617 = vrot.lane.b32.xlu0 %v1547, 19
        %v1618 = vpop.permute.xlu0 %1617
        %1619 = vrot.lane.b32.xlu0 %v1548, 19
        %v1620 = vpop.permute.xlu0 %1619
        %v1621 = vsel %vm1325, %v1550, %v1552
        %v1622 = vsel %vm1325, %v1552, %v1554
        %v1623 = vsel %vm1325, %v1554, %v1556
        %v1624 = vsel %vm1325, %v1558, %v1560
        %v1625 = vsel %vm1325, %v1560, %v1562
        %v1626 = vsel %vm1325, %v1562, %v1564
        %v1627 = vsel %vm1325, %v1566, %v1568
        %v1628 = vsel %vm1325, %v1568, %v1570
        %v1629 = vsel %vm1325, %v1570, %v1572
        %v1630 = vsel %vm1325, %v1574, %v1576
        %v1631 = vsel %vm1325, %v1576, %v1578
        %v1632 = vsel %vm1325, %v1578, %v1580
        %v1633 = vsel %vm1325, %v1582, %v1584
        %v1634 = vsel %vm1325, %v1584, %v1586
        %v1635 = vsel %vm1325, %v1586, %v1588
        %v1636 = vsel %vm1325, %v1590, %v1592
        %v1637 = vsel %vm1325, %v1592, %v1594
        %v1638 = vsel %vm1325, %v1594, %v1596
        %v1639 = vsel %vm1325, %v1598, %v1600
        %v1640 = vsel %vm1325, %v1600, %v1602
        %v1641 = vsel %vm1325, %v1602, %v1604
        %v1642 = vsel %vm1325, %v1606, %v1608
        %v1643 = vsel %vm1325, %v1608, %v1610
        %v1644 = vsel %vm1325, %v1610, %v1612
        %v1645 = vsel %vm1325, %v1614, %v1616
        %v1646 = vsel %vm1325, %v1616, %v1618
        %v1647 = vsel %vm1325, %v1618, %v1620
        %v1676 = vsel %vm1380, %v1447, 0
        %1678 = vmatpush.msra.mxu0 0.0
        %1679 = vmatpush.msra.mxu0 0.0
        %1680 = vmatpush.msra.mxu0 0.0
        %1681 = vmatpush.msra.mxu0 0.0
        %1682 = vmatpush.msra.mxu0 0.0
        %1683 = vmatpush.msra.mxu0 0.0
        %1684 = vmatpush.msra.mxu0 0.0
        %1685 = vmatpush.msra.mxu0 %v1645
        %1686 = vmatpush.msra.mxu0 %v1642
        %1687 = vmatpush.msra.mxu0 %v1639
        %1688 = vmatpush.msra.mxu0 %v1636
        %1689 = vmatpush.msra.mxu0 %v1633
        %1690 = vmatpush.msra.mxu0 %v1630
        %1691 = vmatpush.msra.mxu0 %v1627
        %1692 = vmatpush.msra.mxu0 %v1624
        %1693 = vmatpush.msra.mxu0 %v1621
        %1694 = vmatmul.f32.gmra.mxu0 %v1676
        %v1695 = vpop.f32.mrf.mxu0
        %v1696 = vadd.f32 0.0, %v1695
        %1697 = vdwg.mxu0
        %1698 = vmatpush.msra.mxu0 0.0
        %1699 = vmatpush.msra.mxu0 0.0
        %1700 = vmatpush.msra.mxu0 0.0
        %1701 = vmatpush.msra.mxu0 0.0
        %1702 = vmatpush.msra.mxu0 0.0
        %1703 = vmatpush.msra.mxu0 0.0
        %1704 = vmatpush.msra.mxu0 0.0
        %1705 = vmatpush.msra.mxu0 %v1646
        %1706 = vmatpush.msra.mxu0 %v1643
        %1707 = vmatpush.msra.mxu0 %v1640
        %1708 = vmatpush.msra.mxu0 %v1637
        %1709 = vmatpush.msra.mxu0 %v1634
        %1710 = vmatpush.msra.mxu0 %v1631
        %1711 = vmatpush.msra.mxu0 %v1628
        %1712 = vmatpush.msra.mxu0 %v1625
        %1713 = vmatpush.msra.mxu0 %v1622
        %1714 = vmatmul.f32.gmra.mxu0 %v1676
        %v1715 = vpop.f32.mrf.mxu0
        %v1716 = vadd.f32 0.0, %v1715
        %1717 = vdwg.mxu0
        %1718 = vmatpush.msra.mxu0 0.0
        %1719 = vmatpush.msra.mxu0 0.0
        %1720 = vmatpush.msra.mxu0 0.0
        %1721 = vmatpush.msra.mxu0 0.0
        %1722 = vmatpush.msra.mxu0 0.0
        %1723 = vmatpush.msra.mxu0 0.0
        %1724 = vmatpush.msra.mxu0 0.0
        %1725 = vmatpush.msra.mxu0 %v1647
        %1726 = vmatpush.msra.mxu0 %v1644
        %1727 = vmatpush.msra.mxu0 %v1641
        %1728 = vmatpush.msra.mxu0 %v1638
        %1729 = vmatpush.msra.mxu0 %v1635
        %1730 = vmatpush.msra.mxu0 %v1632
        %1731 = vmatpush.msra.mxu0 %v1629
        %1732 = vmatpush.msra.mxu0 %v1626
        %1733 = vmatpush.msra.mxu0 %v1623
        %1734 = vmatmul.f32.gmra.mxu0 %v1676
        %v1735 = vpop.f32.mrf.mxu0
        %v1736 = vadd.f32 0.0, %v1735
        %1737 = vdwg.mxu0
        %v1738 = vadd.f32 %v1444, %v1696
        %v1739 = vadd.f32 %v1445, %v1716
        %v1740 = vadd.f32 %v1446, %v1736
        %v1741 = vmax.f32 %v1738, 0.0
        %v1742 = vmax.f32 %v1739, 0.0
        %v1743 = vmax.f32 %v1740, 0.0
        %v1744 = vmul.f32 %v1741, %v1128
        %v1745 = vmul.f32 %v1742, %v1129
        %v1746 = vmul.f32 %v1743, %v1130
        %1747 = vst [vmem:[#allocation4 + $0x8] sm:$0xff] %v1744
        %1748 = vst [vmem:[#allocation4 + $0x10] sm:$0xff] %v1745
        %1749 = vst [vmem:[#allocation4 + $0x18] sm:$0xff] %v1746
        %v1750 = vld [vmem:[%s9] sm:$0xf]
        %1752 = vset.pattern.permute.xlu0 0
        %1753 = vperm.xlu0 %1752, %v1750
        %v1754 = vpop.permute.xlu0 %1753
        %v1756 = vld [vmem:[%s8] sm:$0xf]
        %v1757 = vld [vmem:[#allocation4] sm:$0xff]
        %v1758 = vld [vmem:[#allocation4 + $0x8] sm:$0xff]
        %v1759 = vld [vmem:[#allocation4 + $0x10] sm:$0xff]
        %v1760 = vld [vmem:[#allocation4 + $0x18] sm:$0xff]
        %v1761 = vld [vmem:[#allocation4 + $0x8] sm:$0xff]
        %v1762 = vld [vmem:[#allocation4 + $0x10] sm:$0xff]
        %v1763 = vld [vmem:[#allocation4 + $0x18] sm:$0xff]
        %v1764 = vld [vmem:[#allocation4 + $0x20] sm:$0xff]
        %1769 = vrot.lane.b32.xlu0 %v1757, 127
        %v1770 = vpop.permute.xlu0 %1769
        %1771 = vrot.lane.b32.xlu0 %v1758, 127
        %v1772 = vpop.permute.xlu0 %1771
        %1773 = vrot.lane.b32.xlu0 %v1759, 127
        %v1774 = vpop.permute.xlu0 %1773
        %1775 = vrot.lane.b32.xlu0 %v1760, 127
        %v1776 = vpop.permute.xlu0 %1775
        %v1777 = vsel %vm1167, %v1770, %v1772
        %v1778 = vsel %vm1167, %v1772, %v1774
        %v1779 = vsel %vm1167, %v1774, %v1776
        %1780 = vrot.lane.b32.xlu0 %v1757, 126
        %v1781 = vpop.permute.xlu0 %1780
        %1782 = vrot.lane.b32.xlu0 %v1758, 126
        %v1783 = vpop.permute.xlu0 %1782
        %1784 = vrot.lane.b32.xlu0 %v1759, 126
        %v1785 = vpop.permute.xlu0 %1784
        %1786 = vrot.lane.b32.xlu0 %v1760, 126
        %v1787 = vpop.permute.xlu0 %1786
        %v1788 = vsel %vm603, %v1781, %v1783
        %v1789 = vsel %vm603, %v1783, %v1785
        %v1790 = vsel %vm603, %v1785, %v1787
        %1791 = vrot.lane.b32.xlu0 %v1757, 110
        %v1792 = vpop.permute.xlu0 %1791
        %1793 = vrot.lane.b32.xlu0 %v1758, 110
        %v1794 = vpop.permute.xlu0 %1793
        %1795 = vrot.lane.b32.xlu0 %v1759, 110
        %v1796 = vpop.permute.xlu0 %1795
        %1797 = vrot.lane.b32.xlu0 %v1760, 110
        %v1798 = vpop.permute.xlu0 %1797
        %v1799 = vsel %vm1190, %v1792, %v1794
        %v1800 = vsel %vm1190, %v1794, %v1796
        %v1801 = vsel %vm1190, %v1796, %v1798
        %1802 = vrot.lane.b32.xlu0 %v1758, 109
        %v1803 = vpop.permute.xlu0 %1802
        %1804 = vrot.lane.b32.xlu0 %v1759, 109
        %v1805 = vpop.permute.xlu0 %1804
        %1806 = vrot.lane.b32.xlu0 %v1760, 109
        %v1807 = vpop.permute.xlu0 %1806
        %v1808 = vsel %vm1200, %v1803, %v1805
        %v1809 = vsel %vm1200, %v1805, %v1807
        %1814 = vrot.lane.b32.xlu0 %v1761, 108
        %v1815 = vpop.permute.xlu0 %1814
        %1816 = vrot.lane.b32.xlu0 %v1762, 108
        %v1817 = vpop.permute.xlu0 %1816
        %1818 = vrot.lane.b32.xlu0 %v1763, 108
        %v1819 = vpop.permute.xlu0 %1818
        %1820 = vrot.lane.b32.xlu0 %v1764, 108
        %v1821 = vpop.permute.xlu0 %1820
        %v1822 = vsel %vm1215, %v1815, %v1817
        %v1823 = vsel %vm1215, %v1817, %v1819
        %v1824 = vsel %vm1215, %v1819, %v1821
        %1825 = vrot.lane.b32.xlu0 %v1761, 92
        %v1826 = vpop.permute.xlu0 %1825
        %1827 = vrot.lane.b32.xlu0 %v1762, 92
        %v1828 = vpop.permute.xlu0 %1827
        %1829 = vrot.lane.b32.xlu0 %v1763, 92
        %v1830 = vpop.permute.xlu0 %1829
        %1831 = vrot.lane.b32.xlu0 %v1764, 92
        %v1832 = vpop.permute.xlu0 %1831
        %v1833 = vsel %vm615, %v1826, %v1828
        %v1834 = vsel %vm615, %v1828, %v1830
        %v1835 = vsel %vm615, %v1830, %v1832
        %1836 = vrot.lane.b32.xlu0 %v1761, 91
        %v1837 = vpop.permute.xlu0 %1836
        %1838 = vrot.lane.b32.xlu0 %v1762, 91
        %v1839 = vpop.permute.xlu0 %1838
        %1840 = vrot.lane.b32.xlu0 %v1763, 91
        %v1841 = vpop.permute.xlu0 %1840
        %1842 = vrot.lane.b32.xlu0 %v1764, 91
        %v1843 = vpop.permute.xlu0 %1842
        %v1844 = vsel %vm1238, %v1837, %v1839
        %v1845 = vsel %vm1238, %v1839, %v1841
        %v1846 = vsel %vm1238, %v1841, %v1843
        %1847 = vrot.lane.b32.xlu0 %v1761, 90
        %v1848 = vpop.permute.xlu0 %1847
        %1849 = vrot.lane.b32.xlu0 %v1762, 90
        %v1850 = vpop.permute.xlu0 %1849
        %1851 = vrot.lane.b32.xlu0 %v1763, 90
        %v1852 = vpop.permute.xlu0 %1851
        %1853 = vrot.lane.b32.xlu0 %v1764, 90
        %v1854 = vpop.permute.xlu0 %1853
        %v1855 = vsel %vm627, %v1848, %v1850
        %v1856 = vsel %vm627, %v1850, %v1852
        %v1857 = vsel %vm627, %v1852, %v1854
        %1858 = vrot.lane.b32.xlu0 %v1757, 19
        %v1859 = vpop.permute.xlu0 %1858
        %1860 = vrot.lane.b32.xlu0 %v1758, 19
        %v1861 = vpop.permute.xlu0 %1860
        %1862 = vrot.lane.b32.xlu0 %v1759, 19
        %v1863 = vpop.permute.xlu0 %1862
        %1864 = vrot.lane.b32.xlu0 %v1760, 19
        %v1865 = vpop.permute.xlu0 %1864
        %1866 = vrot.lane.b32.xlu0 %v1777, 19
        %v1867 = vpop.permute.xlu0 %1866
        %1868 = vrot.lane.b32.xlu0 %v1778, 19
        %v1869 = vpop.permute.xlu0 %1868
        %1870 = vrot.lane.b32.xlu0 %v1779, 19
        %v1871 = vpop.permute.xlu0 %1870
        %1872 = vrot.lane.b32.xlu0 %v1776, 19
        %v1873 = vpop.permute.xlu0 %1872
        %1874 = vrot.lane.b32.xlu0 %v1788, 19
        %v1875 = vpop.permute.xlu0 %1874
        %1876 = vrot.lane.b32.xlu0 %v1789, 19
        %v1877 = vpop.permute.xlu0 %1876
        %1878 = vrot.lane.b32.xlu0 %v1790, 19
        %v1879 = vpop.permute.xlu0 %1878
        %1880 = vrot.lane.b32.xlu0 %v1787, 19
        %v1881 = vpop.permute.xlu0 %1880
        %1882 = vrot.lane.b32.xlu0 %v1799, 19
        %v1883 = vpop.permute.xlu0 %1882
        %1884 = vrot.lane.b32.xlu0 %v1800, 19
        %v1885 = vpop.permute.xlu0 %1884
        %1886 = vrot.lane.b32.xlu0 %v1801, 19
        %v1887 = vpop.permute.xlu0 %1886
        %1888 = vrot.lane.b32.xlu0 %v1798, 19
        %v1889 = vpop.permute.xlu0 %1888
        %1890 = vrot.lane.b32.xlu0 %v1803, 19
        %v1891 = vpop.permute.xlu0 %1890
        %1892 = vrot.lane.b32.xlu0 %v1808, 19
        %v1893 = vpop.permute.xlu0 %1892
        %1894 = vrot.lane.b32.xlu0 %v1809, 19
        %v1895 = vpop.permute.xlu0 %1894
        %1896 = vrot.lane.b32.xlu0 %v1807, 19
        %v1897 = vpop.permute.xlu0 %1896
        %1898 = vrot.lane.b32.xlu0 %v1815, 19
        %v1899 = vpop.permute.xlu0 %1898
        %1900 = vrot.lane.b32.xlu0 %v1822, 19
        %v1901 = vpop.permute.xlu0 %1900
        %1902 = vrot.lane.b32.xlu0 %v1823, 19
        %v1903 = vpop.permute.xlu0 %1902
        %1904 = vrot.lane.b32.xlu0 %v1824, 19
        %v1905 = vpop.permute.xlu0 %1904
        %1906 = vrot.lane.b32.xlu0 %v1826, 19
        %v1907 = vpop.permute.xlu0 %1906
        %1908 = vrot.lane.b32.xlu0 %v1833, 19
        %v1909 = vpop.permute.xlu0 %1908
        %1910 = vrot.lane.b32.xlu0 %v1834, 19
        %v1911 = vpop.permute.xlu0 %1910
        %1912 = vrot.lane.b32.xlu0 %v1835, 19
        %v1913 = vpop.permute.xlu0 %1912
        %1914 = vrot.lane.b32.xlu0 %v1837, 19
        %v1915 = vpop.permute.xlu0 %1914
        %1916 = vrot.lane.b32.xlu0 %v1844, 19
        %v1917 = vpop.permute.xlu0 %1916
        %1918 = vrot.lane.b32.xlu0 %v1845, 19
        %v1919 = vpop.permute.xlu0 %1918
        %1920 = vrot.lane.b32.xlu0 %v1846, 19
        %v1921 = vpop.permute.xlu0 %1920
        %1922 = vrot.lane.b32.xlu0 %v1848, 19
        %v1923 = vpop.permute.xlu0 %1922
        %1924 = vrot.lane.b32.xlu0 %v1855, 19
        %v1925 = vpop.permute.xlu0 %1924
        %1926 = vrot.lane.b32.xlu0 %v1856, 19
        %v1927 = vpop.permute.xlu0 %1926
        %1928 = vrot.lane.b32.xlu0 %v1857, 19
        %v1929 = vpop.permute.xlu0 %1928
        %v1930 = vsel %vm1325, %v1859, %v1861
        %v1931 = vsel %vm1325, %v1861, %v1863
        %v1932 = vsel %vm1325, %v1863, %v1865
        %v1933 = vsel %vm1325, %v1867, %v1869
        %v1934 = vsel %vm1325, %v1869, %v1871
        %v1935 = vsel %vm1325, %v1871, %v1873
        %v1936 = vsel %vm1325, %v1875, %v1877
        %v1937 = vsel %vm1325, %v1877, %v1879
        %v1938 = vsel %vm1325, %v1879, %v1881
        %v1939 = vsel %vm1325, %v1883, %v1885
        %v1940 = vsel %vm1325, %v1885, %v1887
        %v1941 = vsel %vm1325, %v1887, %v1889
        %v1942 = vsel %vm1325, %v1891, %v1893
        %v1943 = vsel %vm1325, %v1893, %v1895
        %v1944 = vsel %vm1325, %v1895, %v1897
        %v1945 = vsel %vm1325, %v1899, %v1901
        %v1946 = vsel %vm1325, %v1901, %v1903
        %v1947 = vsel %vm1325, %v1903, %v1905
        %v1948 = vsel %vm1325, %v1907, %v1909
        %v1949 = vsel %vm1325, %v1909, %v1911
        %v1950 = vsel %vm1325, %v1911, %v1913
        %v1951 = vsel %vm1325, %v1915, %v1917
        %v1952 = vsel %vm1325, %v1917, %v1919
        %v1953 = vsel %vm1325, %v1919, %v1921
        %v1954 = vsel %vm1325, %v1923, %v1925
        %v1955 = vsel %vm1325, %v1925, %v1927
        %v1956 = vsel %vm1325, %v1927, %v1929
        %v1985 = vsel %vm1380, %v1756, 0
        %1987 = vmatpush.msra.mxu0 0.0
        %1988 = vmatpush.msra.mxu0 0.0
        %1989 = vmatpush.msra.mxu0 0.0
        %1990 = vmatpush.msra.mxu0 0.0
        %1991 = vmatpush.msra.mxu0 0.0
        %1992 = vmatpush.msra.mxu0 0.0
        %1993 = vmatpush.msra.mxu0 0.0
        %1994 = vmatpush.msra.mxu0 %v1954
        %1995 = vmatpush.msra.mxu0 %v1951
        %1996 = vmatpush.msra.mxu0 %v1948
        %1997 = vmatpush.msra.mxu0 %v1945
        %1998 = vmatpush.msra.mxu0 %v1942
        %1999 = vmatpush.msra.mxu0 %v1939
        %2000 = vmatpush.msra.mxu0 %v1936
        %2001 = vmatpush.msra.mxu0 %v1933
        %2002 = vmatpush.msra.mxu0 %v1930
        %2003 = vmatmul.f32.gmra.mxu0 %v1985
        %v2004 = vpop.f32.mrf.mxu0
        %v2005 = vadd.f32 0.0, %v2004
        %2006 = vdwg.mxu0
        %2007 = vmatpush.msra.mxu0 0.0
        %2008 = vmatpush.msra.mxu0 0.0
        %2009 = vmatpush.msra.mxu0 0.0
        %2010 = vmatpush.msra.mxu0 0.0
        %2011 = vmatpush.msra.mxu0 0.0
        %2012 = vmatpush.msra.mxu0 0.0
        %2013 = vmatpush.msra.mxu0 0.0
        %2014 = vmatpush.msra.mxu0 %v1955
        %2015 = vmatpush.msra.mxu0 %v1952
        %2016 = vmatpush.msra.mxu0 %v1949
        %2017 = vmatpush.msra.mxu0 %v1946
        %2018 = vmatpush.msra.mxu0 %v1943
        %2019 = vmatpush.msra.mxu0 %v1940
        %2020 = vmatpush.msra.mxu0 %v1937
        %2021 = vmatpush.msra.mxu0 %v1934
        %2022 = vmatpush.msra.mxu0 %v1931
        %2023 = vmatmul.f32.gmra.mxu0 %v1985
        %v2024 = vpop.f32.mrf.mxu0
        %v2025 = vadd.f32 0.0, %v2024
        %2026 = vdwg.mxu0
        %2027 = vmatpush.msra.mxu0 0.0
        %2028 = vmatpush.msra.mxu0 0.0
        %2029 = vmatpush.msra.mxu0 0.0
        %2030 = vmatpush.msra.mxu0 0.0
        %2031 = vmatpush.msra.mxu0 0.0
        %2032 = vmatpush.msra.mxu0 0.0
        %2033 = vmatpush.msra.mxu0 0.0
        %2034 = vmatpush.msra.mxu0 %v1956
        %2035 = vmatpush.msra.mxu0 %v1953
        %2036 = vmatpush.msra.mxu0 %v1950
        %2037 = vmatpush.msra.mxu0 %v1947
        %2038 = vmatpush.msra.mxu0 %v1944
        %2039 = vmatpush.msra.mxu0 %v1941
        %2040 = vmatpush.msra.mxu0 %v1938
        %2041 = vmatpush.msra.mxu0 %v1935
        %2042 = vmatpush.msra.mxu0 %v1932
        %2043 = vmatmul.f32.gmra.mxu0 %v1985
        %v2044 = vpop.f32.mrf.mxu0
        %v2045 = vadd.f32 0.0, %v2044
        %2046 = vdwg.mxu0
        %v2047 = vadd.f32 %v1754, %v2005
        %v2048 = vadd.f32 %v1754, %v2025
        %v2049 = vadd.f32 %v1754, %v2045
        %v2050 = vmax.f32 %v2047, 0.0
        %v2051 = vmax.f32 %v2048, 0.0
        %v2052 = vmax.f32 %v2049, 0.0
        %v2055 = vrot.slane %v2051, 4
        %vm2056 = vcmask 1043456
        %v2057 = vsel %vm2056, %v2050, %v2055
        %2059 = vst [vmem:[%s477] sm:$0xff] %v2057
        %2060 = vst [vmem:[%s477 + $0x8] sm:$0xf] %v2052
        %s2061 = sand.u32 %s279, 1
        %s2062 = scalar_lea.sflag [#allocation7], %s2061
        %s2063 = sand.u32 %s279, 1
        %s2064 = smul.addr %s2063, 12
        %s2065 = scalar_lea.vmem [#allocation14], %s2064
        // Predicated region
        $region85: #{tpu_custom_call.1} parent=63 // pred_check
          %p2066 = pneg %p289
        $region86: #{tpu_custom_call.1} parent=63 // pred_check_branch
          %2068 = sbr.rel (%p2066) target = $region88
        $region87: #{tpu_custom_call.1} parent=63 // pred_region
          %2070 = vsyncadd %s2062, 0
          %s2071 = smul.addr %s30, 3
          %s2072 = smul.addr %s2071, 4
          %s2073 = scalar_lea.hbm %s11, %s2072
          %s2075 = sshll.u32 %s2065, 4
          %s2076 = int_to_ptr.vmem [resolvable:$true] %s2075
          %s2077 = sshll.u32 %s2073, 4
          %s2078 = int_to_ptr.hbm [resolvable:$true] %s2077
          %2080 = dma.vmem_to_hbm [thread:$0]  %s2076, 192, %s2078, %s2062
        $region88: #{tpu_custom_call.1} parent=63 // pred_fallthru
          _
      $region64: #{tpu_custom_call.1} parent=5 // pred_fallthru
        _
      %p2081 = scmp.le.s32.totalorder 2, %s25
      // Predicated region
      $region89: #{tpu_custom_call.1} parent=5 // pred_check
        %p2082 = pneg %p2081
      $region90: #{tpu_custom_call.1} parent=5 // pred_check_branch
        %2084 = sbr.rel (%p2082) target = $region92
      $region91: #{tpu_custom_call.1} parent=5 // pred_region
        %s2085 = ssub.s32 %s25, 2
        // Predicated region
        $region93: #{tpu_custom_call.1} parent=91 // pred_check
          %p2086 = pneg %p295
        $region94: #{tpu_custom_call.1} parent=91 // pred_check_branch
          %2088 = sbr.rel (%p2086) target = $region96
        $region95: #{tpu_custom_call.1} parent=91 // pred_region
          %s2089 = sand.u32 %s280, 1
          %s2090 = scalar_lea.sflag [#allocation7], %s2089
          %s2091 = sand.u32 %s280, 1
          %s2092 = smul.addr %s2091, 12
          %s2093 = scalar_lea.vmem [#allocation14], %s2092
          %2095 = dma.done %s2090, 192
        $region96: #{tpu_custom_call.1} parent=91 // pred_fallthru
          _
      $region92: #{tpu_custom_call.1} parent=5 // pred_fallthru
        _
    $region6: #{tpu_custom_call.1} parent=1 // loop_footer
      %s29 = sadd.s32 1, %s25
    $region7: #{tpu_custom_call.1} parent=1 // loop_footer_branch
      %24 = sbr.rel target = $region3
    $region8: #{tpu_custom_call.1} parent=1 // loop_exit
      _
    %2096 = vsyncpa [#allocation6], 1
    %s2097 = scalar_lea.sflag [#allocation6], 1
    %2098 = vsyncpa %s2097, 1
    %2099 = vsyncpa [#allocation9], 1
    %2100 = vsyncpa [#allocation12], 1
    %2101 = vsyncpa [#allocation7], 1
    %s2102 = scalar_lea.sflag [#allocation7], 1
    %2103 = vsyncpa %s2102, 1

</llo_original>
